<compile_context>
chip_gen: v7x
topology: tpu7x:2x2x1
jax: 0.10.0
libtpu: 0.0.40
codegen_flags: <defaults>
</compile_context>

<pallas_src>
import jax
import jax.numpy as jnp
from jax import lax
from jax.experimental import pallas as pl
from jax.experimental.pallas import tpu as pltpu

H = W = 16            # spatial size
CIN = 4               # input channels
COUT = 8              # conv output channels
NCLS = 10             # classifier classes
KS = 3                # conv kernel (padding=1 -> "SAME")
HP = H + 2            # padded spatial
WP = W + 2
NPAD = 128            # lane-padded classifier width
NL = 384              # conv/activation lane width per image (>= all valid positions, 3*128)
IMG_L = 512           # per-image padded flat length (>= NL + max tap offset, 4*128)
MAX_OFF = 2 * WP + 2  # largest tap offset (38); NL + MAX_OFF <= IMG_L


def model_kernel(x_ref, wt_ref, bc_ref, wfc_ref, bfc_ref, pool_ref, out_ref):
    # x_ref    : (1, CIN, IMG_L)  padded, flattened image (channel-major, lanes = pixels)
    # wt_ref   : (9, COUT, CIN)   conv weights, one (COUT, CIN) slab per tap
    # bc_ref   : (COUT, 1)        conv bias (broadcasts along lanes)
    # wfc_ref  : (COUT, NPAD)     FC weights, zero-padded to 128 lanes
    # bfc_ref  : (1, NPAD)        FC bias, zero-padded to 128 lanes
    # pool_ref : (1, NL)          masked average row: 1/(H*W) at valid pixels, else 0
    # out_ref  : (1, 8, NPAD)     logits broadcast over 8 sublanes (full-tile store)

    # --- conv as 9 accumulated, lane-shifted matmuls (in-kernel im2col) -----
    acc = jnp.dot(wt_ref[0], x_ref[0, :, pl.ds(0, NL)],
                  preferred_element_type=jnp.float32)            # (COUT, NL)
    for t in range(1, KS * KS):
        off = (t // KS) * WP + (t % KS)                          # static shift
        xs = x_ref[0, :, pl.ds(off, NL)]                         # (CIN, NL)
        acc = acc + jnp.dot(wt_ref[t], xs,
                            preferred_element_type=jnp.float32)  # (COUT, NL)

    # bias + ReLU (lane-dense: only ~3 vregs)
    acc = jnp.maximum(acc + bc_ref[...], 0.0)                    # (COUT, NL)

    # global average pool: masked-average row * activations, lane reduce
    pooled = jnp.sum(acc * pool_ref[...], axis=1, keepdims=True)  # (COUT, 1)

    # FC: broadcast-multiply + sublane reduce (avoids tiny-N matmul/transpose)
    logits = jnp.sum(pooled * wfc_ref[...], axis=0, keepdims=True) + bfc_ref[...]  # (1, NPAD)

    # full (8, 128) unmasked store; wrapper keeps row 0
    out_ref[0] = jnp.broadcast_to(logits, (8, NPAD))


def prepare_params(wconv, bconv, wfc, bfc):
    """Data-independent parameter packing. Call ONCE, outside the per-call path."""
    # (KS, KS, CIN, COUT) -> (9, COUT, CIN); tap t = dy*3 + dx
    wt = jnp.transpose(wconv, (0, 1, 3, 2)).reshape(KS * KS, COUT, CIN)
    bconv_col = bconv.reshape(COUT, 1).astype(jnp.float32)
    wfc_p = jnp.zeros((COUT, NPAD), jnp.float32).at[:, :NCLS].set(wfc)
    bfc_p = jnp.zeros((1, NPAD), jnp.float32).at[:, :NCLS].set(bfc)
    # averaging row over valid padded-grid positions q = h*WP + w, h<H, w<W
    q = jnp.arange(NL)
    valid = ((q // WP) < H) & ((q % WP) < W)
    pool_row = jnp.where(valid, 1.0 / float(H * W), 0.0).astype(jnp.float32).reshape(1, NL)
    return (wt, bconv_col, wfc_p, bfc_p, pool_row)


def baseline_forward(x_nchw, params):
    """clean = x[: B//3]; return model(clean). x_nchw is NCHW float32."""
    wt, bconv_col, wfc_p, bfc_p, pool_row = params
    B = x_nchw.shape[0]
    clean = x_nchw[: B // 3]                                    # torch.split(x, B//3)[0]
    Bc = clean.shape[0]

    # Per-call glue: SAME padding + flatten padded spatial onto the lane axis.
    # (NCHW is already channel-major, so no transpose and no 9x im2col blowup.)
    xp = jnp.pad(clean, ((0, 0), (0, 0), (1, 1), (1, 1)))        # (Bc, CIN, HP, WP)
    xflat = xp.reshape(Bc, CIN, HP * WP)
    xflat = jnp.pad(xflat, ((0, 0), (0, 0), (0, IMG_L - HP * WP)))  # (Bc, CIN, IMG_L)

    out = pl.pallas_call(
        model_kernel,
        out_shape=jax.ShapeDtypeStruct((Bc, 8, NPAD), jnp.float32),
        grid=(Bc,),                                              # one image per step
        in_specs=[
            pl.BlockSpec((1, CIN, IMG_L), lambda b: (b, 0, 0)),  # per-image tile
            pl.BlockSpec((KS * KS, COUT, CIN), lambda b: (0, 0, 0)),  # resident weights
            pl.BlockSpec((COUT, 1), lambda b: (0, 0)),
            pl.BlockSpec((COUT, NPAD), lambda b: (0, 0)),
            pl.BlockSpec((1, NPAD), lambda b: (0, 0)),
            pl.BlockSpec((1, NL), lambda b: (0, 0)),
        ],
        out_specs=pl.BlockSpec((1, 8, NPAD), lambda b: (b, 0, 0)),
        compiler_params=pltpu.CompilerParams(
            dimension_semantics=("parallel",)),                  # megacore-shardable
    )(xflat, wt, bconv_col, wfc_p, bfc_p, pool_row)

    return out[:, 0, :NCLS]                                      # (B//3, NCLS)


if __name__ == "__main__":
    key = jax.random.PRNGKey(0)
    kx, kw1, kb1, kw2, kb2 = jax.random.split(key, 5)

    B = 6  # batch is a multiple of 3; "clean" chunk = first B//3 images
    x = jax.random.normal(kx, (B, CIN, H, W), jnp.float32)

    # Deterministic synthetic parameters for the wrapped model.
    wconv = jax.random.normal(kw1, (KS, KS, CIN, COUT), jnp.float32) * 0.1
    bconv = jax.random.normal(kb1, (1, COUT), jnp.float32) * 0.1
    wfc = jax.random.normal(kw2, (COUT, NCLS), jnp.float32) * 0.1
    bfc = jax.random.normal(kb2, (1, NCLS), jnp.float32) * 0.1

    params = prepare_params(wconv, bconv, wfc, bfc)              # hoisted: done once
    fwd = jax.jit(baseline_forward)
    out = jax.block_until_ready(fwd(x, params))

    # Pure-JAX reference of the same semantics.
    clean = x[: B // 3]
    xb = jnp.transpose(clean, (0, 2, 3, 1))
    conv = lax.conv_general_dilated(
        xb, wconv, window_strides=(1, 1), padding="SAME",
        dimension_numbers=("NHWC", "HWIO", "NHWC"))
    conv = jnp.maximum(conv + bconv[0], 0.0)
    pooled = jnp.mean(conv, axis=(1, 2))
    ref = pooled @ wfc + bfc[0]

    assert out.shape == (B // 3, NCLS), out.shape
    assert jnp.allclose(out, ref, atol=2e-4, rtol=2e-4), (
        float(jnp.max(jnp.abs(out - ref))))
    print("KERNEL_OK")
</pallas_src>

<mosaic_0001>
module attributes {stable_mosaic.version = 11 : i64} {
  func.func @model_kernel(%arg0: i32, %arg1: memref<1x4x512xf32, #tpu.memory_space<vmem>>, %arg2: memref<9x8x4xf32, #tpu.memory_space<vmem>>, %arg3: memref<8x1xf32, #tpu.memory_space<vmem>>, %arg4: memref<8x128xf32, #tpu.memory_space<vmem>>, %arg5: memref<1x128xf32, #tpu.memory_space<vmem>>, %arg6: memref<1x384xf32, #tpu.memory_space<vmem>>, %arg7: memref<1x8x128xf32, #tpu.memory_space<vmem>>) attributes {dimension_semantics = [#tpu.dimension_semantics<parallel>], iteration_bounds = array<i64: 2>, scalar_prefetch = 0 : i64, scratch_operands = 0 : i64, tpu.core_type = #tpu.core_type<tc>, window_params = [{transform_indices = @transform_0, window_bounds = array<i64: 1, 4, 512>}, {pipeline_mode = #tpu.pipeline_mode<synchronous>, transform_indices = @transform_1, window_bounds = array<i64: 9, 8, 4>}, {pipeline_mode = #tpu.pipeline_mode<synchronous>, transform_indices = @transform_2, window_bounds = array<i64: 8, 1>}, {pipeline_mode = #tpu.pipeline_mode<synchronous>, transform_indices = @transform_3, window_bounds = array<i64: 8, 128>}, {pipeline_mode = #tpu.pipeline_mode<synchronous>, transform_indices = @transform_4, window_bounds = array<i64: 1, 128>}, {pipeline_mode = #tpu.pipeline_mode<synchronous>, transform_indices = @transform_5, window_bounds = array<i64: 1, 384>}, {transform_indices = @transform_6, window_bounds = array<i64: 1, 8, 128>}]} {
    %c0 = arith.constant 0 : index
    %c0_0 = arith.constant 0 : index
    %c0_1 = arith.constant 0 : index
    %0 = vector.load %arg2[%c0, %c0_0, %c0_1] : memref<9x8x4xf32, #tpu.memory_space<vmem>>, vector<1x8x4xf32>
    %1 = vector.shape_cast %0 : vector<1x8x4xf32> to vector<8x4xf32>
    %c0_2 = arith.constant 0 : index
    %c0_3 = arith.constant 0 : index
    %c0_4 = arith.constant 0 : index
    %2 = vector.load %arg1[%c0_2, %c0_3, %c0_4] : memref<1x4x512xf32, #tpu.memory_space<vmem>>, vector<1x4x384xf32>
    %3 = vector.shape_cast %2 : vector<1x4x384xf32> to vector<4x384xf32>
    %cst = arith.constant dense<0.000000e+00> : vector<8x384xf32>
    %4 = tpu.matmul %1, %3, %cst {dimension_numbers = #tpu.dot_dimension_numbers<[1], [0], [0], [1], [0, 0, 1, 1], [], []>} : vector<8x4xf32>, vector<4x384xf32>, vector<8x384xf32> -> vector<8x384xf32>
    %c0_5 = arith.constant 0 : index
    %c0_6 = arith.constant 0 : index
    %c1 = arith.constant 1 : index
    %5 = vector.load %arg1[%c0_5, %c0_6, %c1] : memref<1x4x512xf32, #tpu.memory_space<vmem>>, vector<1x4x384xf32>
    %6 = vector.shape_cast %5 : vector<1x4x384xf32> to vector<4x384xf32>
    %c1_7 = arith.constant 1 : index
    %c0_8 = arith.constant 0 : index
    %c0_9 = arith.constant 0 : index
    %7 = vector.load %arg2[%c1_7, %c0_8, %c0_9] : memref<9x8x4xf32, #tpu.memory_space<vmem>>, vector<1x8x4xf32>
    %8 = vector.shape_cast %7 : vector<1x8x4xf32> to vector<8x4xf32>
    %cst_10 = arith.constant dense<0.000000e+00> : vector<8x384xf32>
    %9 = tpu.matmul %8, %6, %cst_10 {dimension_numbers = #tpu.dot_dimension_numbers<[1], [0], [0], [1], [0, 0, 1, 1], [], []>} : vector<8x4xf32>, vector<4x384xf32>, vector<8x384xf32> -> vector<8x384xf32>
    %10 = arith.addf %4, %9 : vector<8x384xf32>
    %c0_11 = arith.constant 0 : index
    %c0_12 = arith.constant 0 : index
    %c2 = arith.constant 2 : index
    %11 = vector.load %arg1[%c0_11, %c0_12, %c2] : memref<1x4x512xf32, #tpu.memory_space<vmem>>, vector<1x4x384xf32>
    %12 = vector.shape_cast %11 : vector<1x4x384xf32> to vector<4x384xf32>
    %c2_13 = arith.constant 2 : index
    %c0_14 = arith.constant 0 : index
    %c0_15 = arith.constant 0 : index
    %13 = vector.load %arg2[%c2_13, %c0_14, %c0_15] : memref<9x8x4xf32, #tpu.memory_space<vmem>>, vector<1x8x4xf32>
    %14 = vector.shape_cast %13 : vector<1x8x4xf32> to vector<8x4xf32>
    %cst_16 = arith.constant dense<0.000000e+00> : vector<8x384xf32>
    %15 = tpu.matmul %14, %12, %cst_16 {dimension_numbers = #tpu.dot_dimension_numbers<[1], [0], [0], [1], [0, 0, 1, 1], [], []>} : vector<8x4xf32>, vector<4x384xf32>, vector<8x384xf32> -> vector<8x384xf32>
    %16 = arith.addf %10, %15 : vector<8x384xf32>
    %c0_17 = arith.constant 0 : index
    %c0_18 = arith.constant 0 : index
    %c18 = arith.constant 18 : index
    %17 = vector.load %arg1[%c0_17, %c0_18, %c18] : memref<1x4x512xf32, #tpu.memory_space<vmem>>, vector<1x4x384xf32>
    %18 = vector.shape_cast %17 : vector<1x4x384xf32> to vector<4x384xf32>
    %c3 = arith.constant 3 : index
    %c0_19 = arith.constant 0 : index
    %c0_20 = arith.constant 0 : index
    %19 = vector.load %arg2[%c3, %c0_19, %c0_20] : memref<9x8x4xf32, #tpu.memory_space<vmem>>, vector<1x8x4xf32>
    %20 = vector.shape_cast %19 : vector<1x8x4xf32> to vector<8x4xf32>
    %cst_21 = arith.constant dense<0.000000e+00> : vector<8x384xf32>
    %21 = tpu.matmul %20, %18, %cst_21 {dimension_numbers = #tpu.dot_dimension_numbers<[1], [0], [0], [1], [0, 0, 1, 1], [], []>} : vector<8x4xf32>, vector<4x384xf32>, vector<8x384xf32> -> vector<8x384xf32>
    %22 = arith.addf %16, %21 : vector<8x384xf32>
    %c0_22 = arith.constant 0 : index
    %c0_23 = arith.constant 0 : index
    %c19 = arith.constant 19 : index
    %23 = vector.load %arg1[%c0_22, %c0_23, %c19] : memref<1x4x512xf32, #tpu.memory_space<vmem>>, vector<1x4x384xf32>
    %24 = vector.shape_cast %23 : vector<1x4x384xf32> to vector<4x384xf32>
    %c4 = arith.constant 4 : index
    %c0_24 = arith.constant 0 : index
    %c0_25 = arith.constant 0 : index
    %25 = vector.load %arg2[%c4, %c0_24, %c0_25] : memref<9x8x4xf32, #tpu.memory_space<vmem>>, vector<1x8x4xf32>
    %26 = vector.shape_cast %25 : vector<1x8x4xf32> to vector<8x4xf32>
    %cst_26 = arith.constant dense<0.000000e+00> : vector<8x384xf32>
    %27 = tpu.matmul %26, %24, %cst_26 {dimension_numbers = #tpu.dot_dimension_numbers<[1], [0], [0], [1], [0, 0, 1, 1], [], []>} : vector<8x4xf32>, vector<4x384xf32>, vector<8x384xf32> -> vector<8x384xf32>
    %28 = arith.addf %22, %27 : vector<8x384xf32>
    %c0_27 = arith.constant 0 : index
    %c0_28 = arith.constant 0 : index
    %c20 = arith.constant 20 : index
    %29 = vector.load %arg1[%c0_27, %c0_28, %c20] : memref<1x4x512xf32, #tpu.memory_space<vmem>>, vector<1x4x384xf32>
    %30 = vector.shape_cast %29 : vector<1x4x384xf32> to vector<4x384xf32>
    %c5 = arith.constant 5 : index
    %c0_29 = arith.constant 0 : index
    %c0_30 = arith.constant 0 : index
    %31 = vector.load %arg2[%c5, %c0_29, %c0_30] : memref<9x8x4xf32, #tpu.memory_space<vmem>>, vector<1x8x4xf32>
    %32 = vector.shape_cast %31 : vector<1x8x4xf32> to vector<8x4xf32>
    %cst_31 = arith.constant dense<0.000000e+00> : vector<8x384xf32>
    %33 = tpu.matmul %32, %30, %cst_31 {dimension_numbers = #tpu.dot_dimension_numbers<[1], [0], [0], [1], [0, 0, 1, 1], [], []>} : vector<8x4xf32>, vector<4x384xf32>, vector<8x384xf32> -> vector<8x384xf32>
    %34 = arith.addf %28, %33 : vector<8x384xf32>
    %c0_32 = arith.constant 0 : index
    %c0_33 = arith.constant 0 : index
    %c36 = arith.constant 36 : index
    %35 = vector.load %arg1[%c0_32, %c0_33, %c36] : memref<1x4x512xf32, #tpu.memory_space<vmem>>, vector<1x4x384xf32>
    %36 = vector.shape_cast %35 : vector<1x4x384xf32> to vector<4x384xf32>
    %c6 = arith.constant 6 : index
    %c0_34 = arith.constant 0 : index
    %c0_35 = arith.constant 0 : index
    %37 = vector.load %arg2[%c6, %c0_34, %c0_35] : memref<9x8x4xf32, #tpu.memory_space<vmem>>, vector<1x8x4xf32>
    %38 = vector.shape_cast %37 : vector<1x8x4xf32> to vector<8x4xf32>
    %cst_36 = arith.constant dense<0.000000e+00> : vector<8x384xf32>
    %39 = tpu.matmul %38, %36, %cst_36 {dimension_numbers = #tpu.dot_dimension_numbers<[1], [0], [0], [1], [0, 0, 1, 1], [], []>} : vector<8x4xf32>, vector<4x384xf32>, vector<8x384xf32> -> vector<8x384xf32>
    %40 = arith.addf %34, %39 : vector<8x384xf32>
    %c0_37 = arith.constant 0 : index
    %c0_38 = arith.constant 0 : index
    %c37 = arith.constant 37 : index
    %41 = vector.load %arg1[%c0_37, %c0_38, %c37] : memref<1x4x512xf32, #tpu.memory_space<vmem>>, vector<1x4x384xf32>
    %42 = vector.shape_cast %41 : vector<1x4x384xf32> to vector<4x384xf32>
    %c7 = arith.constant 7 : index
    %c0_39 = arith.constant 0 : index
    %c0_40 = arith.constant 0 : index
    %43 = vector.load %arg2[%c7, %c0_39, %c0_40] : memref<9x8x4xf32, #tpu.memory_space<vmem>>, vector<1x8x4xf32>
    %44 = vector.shape_cast %43 : vector<1x8x4xf32> to vector<8x4xf32>
    %cst_41 = arith.constant dense<0.000000e+00> : vector<8x384xf32>
    %45 = tpu.matmul %44, %42, %cst_41 {dimension_numbers = #tpu.dot_dimension_numbers<[1], [0], [0], [1], [0, 0, 1, 1], [], []>} : vector<8x4xf32>, vector<4x384xf32>, vector<8x384xf32> -> vector<8x384xf32>
    %46 = arith.addf %40, %45 : vector<8x384xf32>
    %c0_42 = arith.constant 0 : index
    %c0_43 = arith.constant 0 : index
    %c38 = arith.constant 38 : index
    %47 = vector.load %arg1[%c0_42, %c0_43, %c38] : memref<1x4x512xf32, #tpu.memory_space<vmem>>, vector<1x4x384xf32>
    %48 = vector.shape_cast %47 : vector<1x4x384xf32> to vector<4x384xf32>
    %c8 = arith.constant 8 : index
    %c0_44 = arith.constant 0 : index
    %c0_45 = arith.constant 0 : index
    %49 = vector.load %arg2[%c8, %c0_44, %c0_45] : memref<9x8x4xf32, #tpu.memory_space<vmem>>, vector<1x8x4xf32>
    %50 = vector.shape_cast %49 : vector<1x8x4xf32> to vector<8x4xf32>
    %cst_46 = arith.constant dense<0.000000e+00> : vector<8x384xf32>
    %51 = tpu.matmul %50, %48, %cst_46 {dimension_numbers = #tpu.dot_dimension_numbers<[1], [0], [0], [1], [0, 0, 1, 1], [], []>} : vector<8x4xf32>, vector<4x384xf32>, vector<8x384xf32> -> vector<8x384xf32>
    %52 = arith.addf %46, %51 : vector<8x384xf32>
    %c0_47 = arith.constant 0 : index
    %c0_48 = arith.constant 0 : index
    %53 = vector.load %arg3[%c0_47, %c0_48] : memref<8x1xf32, #tpu.memory_space<vmem>>, vector<8x1xf32>
    %54 = vector.broadcast %53 : vector<8x1xf32> to vector<8x384xf32>
    %55 = arith.addf %52, %54 : vector<8x384xf32>
    %cst_49 = arith.constant 0.000000e+00 : f32
    %56 = vector.broadcast %cst_49 : f32 to vector<8x384xf32>
    %57 = arith.maximumf %55, %56 : vector<8x384xf32>
    %c0_50 = arith.constant 0 : index
    %c0_51 = arith.constant 0 : index
    %58 = vector.load %arg6[%c0_50, %c0_51] : memref<1x384xf32, #tpu.memory_space<vmem>>, vector<1x384xf32>
    %59 = vector.broadcast %58 : vector<1x384xf32> to vector<8x384xf32>
    %60 = arith.mulf %57, %59 : vector<8x384xf32>
    %cst_52 = arith.constant dense<0.000000e+00> : vector<8xf32>
    %61 = vector.multi_reduction <add>, %60, %cst_52 [1] : vector<8x384xf32> to vector<8xf32>
    %62 = vector.shape_cast %61 : vector<8xf32> to vector<8x1xf32>
    %c0_53 = arith.constant 0 : index
    %c0_54 = arith.constant 0 : index
    %63 = vector.load %arg4[%c0_53, %c0_54] : memref<8x128xf32, #tpu.memory_space<vmem>>, vector<8x128xf32>
    %64 = vector.broadcast %62 : vector<8x1xf32> to vector<8x128xf32>
    %65 = arith.mulf %64, %63 : vector<8x128xf32>
    %cst_55 = arith.constant dense<0.000000e+00> : vector<128xf32>
    %66 = vector.multi_reduction <add>, %65, %cst_55 [0] : vector<8x128xf32> to vector<128xf32>
    %67 = vector.shape_cast %66 : vector<128xf32> to vector<1x128xf32>
    %c0_56 = arith.constant 0 : index
    %c0_57 = arith.constant 0 : index
    %68 = vector.load %arg5[%c0_56, %c0_57] : memref<1x128xf32, #tpu.memory_space<vmem>>, vector<1x128xf32>
    %69 = arith.addf %67, %68 : vector<1x128xf32>
    %70 = vector.shape_cast %69 : vector<1x128xf32> to vector<1x128xf32>
    %71 = vector.broadcast %70 : vector<1x128xf32> to vector<8x128xf32>
    %c0_58 = arith.constant 0 : index
    %c0_59 = arith.constant 0 : index
    %c0_60 = arith.constant 0 : index
    %72 = vector.load %arg7[%c0_58, %c0_59, %c0_60] : memref<1x8x128xf32, #tpu.memory_space<vmem>>, vector<1x8x128xf32>
    %73 = vector.shape_cast %72 : vector<1x8x128xf32> to vector<8x128xf32>
    %74 = vector.shape_cast %71 : vector<8x128xf32> to vector<1x8x128xf32>
    tpu.vector_store %arg7[%c0_58, %c0_59, %c0_60], %74 {strides = array<i32>} : memref<1x8x128xf32, #tpu.memory_space<vmem>>, vector<1x8x128xf32>,
    return
  }
  func.func @transform_0(%arg0: i32) -> (i32, i32, i32) {
    %c0_i32 = arith.constant 0 : i32
    %c0_i32_0 = arith.constant 0 : i32
    %c0_i32_1 = arith.constant 0 : i32
    return %arg0, %c0_i32, %c0_i32_0 : i32, i32, i32
  }
  func.func @transform_1(%arg0: i32) -> (i32, i32, i32) {
    %c0_i32 = arith.constant 0 : i32
    %c0_i32_0 = arith.constant 0 : i32
    %c0_i32_1 = arith.constant 0 : i32
    %c0_i32_2 = arith.constant 0 : i32
    return %c0_i32, %c0_i32_0, %c0_i32_1 : i32, i32, i32
  }
  func.func @transform_2(%arg0: i32) -> (i32, i32) {
    %c0_i32 = arith.constant 0 : i32
    %c0_i32_0 = arith.constant 0 : i32
    %c0_i32_1 = arith.constant 0 : i32
    return %c0_i32, %c0_i32_0 : i32, i32
  }
  func.func @transform_3(%arg0: i32) -> (i32, i32) {
    %c0_i32 = arith.constant 0 : i32
    %c0_i32_0 = arith.constant 0 : i32
    %c0_i32_1 = arith.constant 0 : i32
    return %c0_i32, %c0_i32_0 : i32, i32
  }
  func.func @transform_4(%arg0: i32) -> (i32, i32) {
    %c0_i32 = arith.constant 0 : i32
    %c0_i32_0 = arith.constant 0 : i32
    %c0_i32_1 = arith.constant 0 : i32
    return %c0_i32, %c0_i32_0 : i32, i32
  }
  func.func @transform_5(%arg0: i32) -> (i32, i32) {
    %c0_i32 = arith.constant 0 : i32
    %c0_i32_0 = arith.constant 0 : i32
    %c0_i32_1 = arith.constant 0 : i32
    return %c0_i32, %c0_i32_0 : i32, i32
  }
  func.func @transform_6(%arg0: i32) -> (i32, i32, i32) {
    %c0_i32 = arith.constant 0 : i32
    %c0_i32_0 = arith.constant 0 : i32
    %c0_i32_1 = arith.constant 0 : i32
    return %arg0, %c0_i32, %c0_i32_0 : i32, i32, i32
  }
}

</mosaic_0001>

<llo_original>
// kernel: baseline_forward.1
$region0: #{baseline_forward.1}
  #allocation0 [shape = 'u32[]', space=smem, size = 0x4, offset = 0x4, fixed_abs, tag = 'smem constant byte address 0x4 - core index']
  #allocation1 [shape = 'u32[144,128]{1,0:T(1,128)}', space=vmem, size = 0x12000, scoped, tag = 'internal scratch']
  %s0 = inlined_call_operand.vmem [shape: f32[2,4,512], index: 0, kind: input, shape index: {}]
  %s1 = inlined_call_operand.vmem [shape: f32[9,8,4], index: 1, kind: input, shape index: {}]
  %s2 = inlined_call_operand.vmem [shape: f32[8,1], index: 2, kind: input, shape index: {}]
  %s3 = inlined_call_operand.vmem [shape: f32[8,128], index: 3, kind: input, shape index: {}]
  %s4 = inlined_call_operand.vmem [shape: f32[1,128], index: 4, kind: input, shape index: {}]
  %s5 = inlined_call_operand.vmem [shape: f32[1,384], index: 5, kind: input, shape index: {}]
  %s6 = inlined_call_operand.vmem [shape: f32[2,8,128], index: 6, kind: output, shape index: {}]
  %s7 = sld [smem:[#allocation0]]
  $region57: #{baseline_forward.1} parent=0
    _
  %s9 = ssub.s32 1, %s7
  %s10 = scalar_select 0, %s9, %s7
  loop: start=0, step=1, limit=4
  $region2: #{baseline_forward.1} parent=0 // loop_pre_header
    _
  $region3: #{baseline_forward.1} parent=0 // loop_header
    %s12 = sphi 0, %s16
    %p13 = scmp.ge.s32.totalorder %s12, 4
    %s22 = sphi 0, %s24
    %s25 = sphi 0, %s22
    %s26 = sphi 0, %s25
    %s42 = sphi 0, %s26
    %s46 = sphi 0, %s46
    %s48 = sphi 0, %s46
    %s49 = sphi 0, %s48
    %s63 = sphi 0, %s49
    %s67 = sphi 0, %s67
    %s69 = sphi 0, %s67
    %s70 = sphi 0, %s69
    %s84 = sphi 0, %s70
    %s88 = sphi 0, %s88
    %s90 = sphi 0, %s88
    %s91 = sphi 0, %s90
    %s105 = sphi 0, %s91
    %s109 = sphi 0, %s109
    %s111 = sphi 0, %s109
    %s112 = sphi 0, %s111
    %s126 = sphi 0, %s112
    %s130 = sphi 0, %s130
    %s132 = sphi 0, %s130
    %s133 = sphi 0, %s132
    %s147 = sphi 0, %s133
    %s153 = sphi 0, %s155
    %s156 = sphi 0, %s153
    %s157 = sphi 0, %s156
    %s173 = sphi 0, %s157
  $region4: #{baseline_forward.1} parent=0 // loop_header_branch
    %15 = sbr.rel (%p13) target = $region8
  $region5: #{baseline_forward.1} parent=0 // loop_body
    %s17 = ssub.s32 %s12, 1
    %s18 = ssub.s32 %s12, 2
    %s19 = sadd.s32 %s12, 1
    %s20 = ssub.s32 %s12, %s19
    %p21 = scmp.eq.s32.totalorder %s20, 0
    %s23 = sadd.s32 %s22, 1
    %s24 = scalar_select %p21, %s22, %s23
    %p27 = pneg %p21
    %p28 = scmp.eq.s32.totalorder %s12, 1
    %p29 = por %p27, %p28
    %p30 = scmp.ne.s32.totalorder %s22, %s25
    %p31 = scmp.eq.s32.totalorder %s12, 0
    %p32 = por %p30, %p31
    %p33 = scmp.ne.s32.totalorder %s22, %s25
    %p34 = scmp.eq.s32.totalorder %s17, 1
    %p35 = por %p33, %p34
    %p36 = scmp.ne.s32.totalorder %s25, %s26
    %p37 = scmp.eq.s32.totalorder %s17, 0
    %p38 = por %p36, %p37
    %p39 = scmp.ne.s32.totalorder %s25, %s26
    %p40 = scmp.eq.s32.totalorder %s18, 1
    %p41 = por %p39, %p40
    %p43 = scmp.ne.s32.totalorder %s26, %s42
    %p44 = scmp.eq.s32.totalorder %s18, 0
    %p45 = por %p43, %p44
    %s47 = sadd.s32 %s46, 1
    %p50 = scmp.eq.s32.totalorder %s12, 1
    %p51 = scmp.ne.s32.totalorder %s46, %s48
    %p52 = scmp.eq.s32.totalorder %s12, 0
    %p53 = por %p51, %p52
    %p54 = scmp.ne.s32.totalorder %s46, %s48
    %p55 = scmp.eq.s32.totalorder %s17, 1
    %p56 = por %p54, %p55
    %p57 = scmp.ne.s32.totalorder %s48, %s49
    %p58 = scmp.eq.s32.totalorder %s17, 0
    %p59 = por %p57, %p58
    %p60 = scmp.ne.s32.totalorder %s48, %s49
    %p61 = scmp.eq.s32.totalorder %s18, 1
    %p62 = por %p60, %p61
    %p64 = scmp.ne.s32.totalorder %s49, %s63
    %p65 = scmp.eq.s32.totalorder %s18, 0
    %p66 = por %p64, %p65
    %s68 = sadd.s32 %s67, 1
    %p71 = scmp.eq.s32.totalorder %s12, 1
    %p72 = scmp.ne.s32.totalorder %s67, %s69
    %p73 = scmp.eq.s32.totalorder %s12, 0
    %p74 = por %p72, %p73
    %p75 = scmp.ne.s32.totalorder %s67, %s69
    %p76 = scmp.eq.s32.totalorder %s17, 1
    %p77 = por %p75, %p76
    %p78 = scmp.ne.s32.totalorder %s69, %s70
    %p79 = scmp.eq.s32.totalorder %s17, 0
    %p80 = por %p78, %p79
    %p81 = scmp.ne.s32.totalorder %s69, %s70
    %p82 = scmp.eq.s32.totalorder %s18, 1
    %p83 = por %p81, %p82
    %p85 = scmp.ne.s32.totalorder %s70, %s84
    %p86 = scmp.eq.s32.totalorder %s18, 0
    %p87 = por %p85, %p86
    %s89 = sadd.s32 %s88, 1
    %p92 = scmp.eq.s32.totalorder %s12, 1
    %p93 = scmp.ne.s32.totalorder %s88, %s90
    %p94 = scmp.eq.s32.totalorder %s12, 0
    %p95 = por %p93, %p94
    %p96 = scmp.ne.s32.totalorder %s88, %s90
    %p97 = scmp.eq.s32.totalorder %s17, 1
    %p98 = por %p96, %p97
    %p99 = scmp.ne.s32.totalorder %s90, %s91
    %p100 = scmp.eq.s32.totalorder %s17, 0
    %p101 = por %p99, %p100
    %p102 = scmp.ne.s32.totalorder %s90, %s91
    %p103 = scmp.eq.s32.totalorder %s18, 1
    %p104 = por %p102, %p103
    %p106 = scmp.ne.s32.totalorder %s91, %s105
    %p107 = scmp.eq.s32.totalorder %s18, 0
    %p108 = por %p106, %p107
    %s110 = sadd.s32 %s109, 1
    %p113 = scmp.eq.s32.totalorder %s12, 1
    %p114 = scmp.ne.s32.totalorder %s109, %s111
    %p115 = scmp.eq.s32.totalorder %s12, 0
    %p116 = por %p114, %p115
    %p117 = scmp.ne.s32.totalorder %s109, %s111
    %p118 = scmp.eq.s32.totalorder %s17, 1
    %p119 = por %p117, %p118
    %p120 = scmp.ne.s32.totalorder %s111, %s112
    %p121 = scmp.eq.s32.totalorder %s17, 0
    %p122 = por %p120, %p121
    %p123 = scmp.ne.s32.totalorder %s111, %s112
    %p124 = scmp.eq.s32.totalorder %s18, 1
    %p125 = por %p123, %p124
    %p127 = scmp.ne.s32.totalorder %s112, %s126
    %p128 = scmp.eq.s32.totalorder %s18, 0
    %p129 = por %p127, %p128
    %s131 = sadd.s32 %s130, 1
    %p134 = scmp.eq.s32.totalorder %s12, 1
    %p135 = scmp.ne.s32.totalorder %s130, %s132
    %p136 = scmp.eq.s32.totalorder %s12, 0
    %p137 = por %p135, %p136
    %p138 = scmp.ne.s32.totalorder %s130, %s132
    %p139 = scmp.eq.s32.totalorder %s17, 1
    %p140 = por %p138, %p139
    %p141 = scmp.ne.s32.totalorder %s132, %s133
    %p142 = scmp.eq.s32.totalorder %s17, 0
    %p143 = por %p141, %p142
    %p144 = scmp.ne.s32.totalorder %s132, %s133
    %p145 = scmp.eq.s32.totalorder %s18, 1
    %p146 = por %p144, %p145
    %p148 = scmp.ne.s32.totalorder %s133, %s147
    %p149 = scmp.eq.s32.totalorder %s18, 0
    %p150 = por %p148, %p149
    %s151 = ssub.s32 %s12, %s19
    %p152 = scmp.eq.s32.totalorder %s151, 0
    %s154 = sadd.s32 %s153, 1
    %s155 = scalar_select %p152, %s153, %s154
    %p158 = pneg %p152
    %p159 = scmp.eq.s32.totalorder %s12, 1
    %p160 = por %p158, %p159
    %p161 = scmp.ne.s32.totalorder %s153, %s156
    %p162 = scmp.eq.s32.totalorder %s12, 0
    %p163 = por %p161, %p162
    %p164 = scmp.ne.s32.totalorder %s153, %s156
    %p165 = scmp.eq.s32.totalorder %s17, 1
    %p166 = por %p164, %p165
    %p167 = scmp.ne.s32.totalorder %s156, %s157
    %p168 = scmp.eq.s32.totalorder %s17, 0
    %p169 = por %p167, %p168
    %p170 = scmp.ne.s32.totalorder %s156, %s157
    %p171 = scmp.eq.s32.totalorder %s18, 1
    %p172 = por %p170, %p171
    %p174 = scmp.ne.s32.totalorder %s157, %s173
    %p175 = scmp.eq.s32.totalorder %s18, 0
    %p176 = por %p174, %p175
    %p177 = scmp.le.s32.totalorder 1, %s12
    %p178 = scmp.lt.s32.totalorder %s12, 3
    %p179 = pnand %p177, %p178
    %p180 = pneg %p179
    // Predicated region
    $region9: #{baseline_forward.1} parent=5 // pred_check
      _
    $region10: #{baseline_forward.1} parent=5 // pred_check_branch
      %182 = sbr.rel (%p179) target = $region12
    $region11: #{baseline_forward.1} parent=5 // pred_region
      %s183 = ssub.s32 %s12, 1
      // Predicated region
      $region13: #{baseline_forward.1} parent=11 // pred_check
        %p184 = pneg %p59
      $region14: #{baseline_forward.1} parent=11 // pred_check_branch
        %186 = sbr.rel (%p184) target = $region16
      $region15: #{baseline_forward.1} parent=11 // pred_region
        _
      $region16: #{baseline_forward.1} parent=11 // pred_fallthru
        _
      // Predicated region
      $region17: #{baseline_forward.1} parent=11 // pred_check
        %p187 = pneg %p80
      $region18: #{baseline_forward.1} parent=11 // pred_check_branch
        %189 = sbr.rel (%p187) target = $region20
      $region19: #{baseline_forward.1} parent=11 // pred_region
        _
      $region20: #{baseline_forward.1} parent=11 // pred_fallthru
        _
      // Predicated region
      $region21: #{baseline_forward.1} parent=11 // pred_check
        %p190 = pneg %p101
      $region22: #{baseline_forward.1} parent=11 // pred_check_branch
        %192 = sbr.rel (%p190) target = $region24
      $region23: #{baseline_forward.1} parent=11 // pred_region
        _
      $region24: #{baseline_forward.1} parent=11 // pred_fallthru
        _
      // Predicated region
      $region25: #{baseline_forward.1} parent=11 // pred_check
        %p193 = pneg %p122
      $region26: #{baseline_forward.1} parent=11 // pred_check_branch
        %195 = sbr.rel (%p193) target = $region28
      $region27: #{baseline_forward.1} parent=11 // pred_region
        _
      $region28: #{baseline_forward.1} parent=11 // pred_fallthru
        _
      // Predicated region
      $region29: #{baseline_forward.1} parent=11 // pred_check
        %p196 = pneg %p143
      $region30: #{baseline_forward.1} parent=11 // pred_check_branch
        %198 = sbr.rel (%p196) target = $region32
      $region31: #{baseline_forward.1} parent=11 // pred_region
        _
      $region32: #{baseline_forward.1} parent=11 // pred_fallthru
        _
    $region12: #{baseline_forward.1} parent=5 // pred_fallthru
      _
    %p199 = scmp.lt.s32.totalorder %s12, 2
    // Predicated region
    $region33: #{baseline_forward.1} parent=5 // pred_check
      %p200 = pneg %p199
    $region34: #{baseline_forward.1} parent=5 // pred_check_branch
      %202 = sbr.rel (%p200) target = $region36
    $region35: #{baseline_forward.1} parent=5 // pred_region
      // Predicated region
      $region37: #{baseline_forward.1} parent=35 // pred_check
        %p203 = pneg %p32
      $region38: #{baseline_forward.1} parent=35 // pred_check_branch
        %205 = sbr.rel (%p203) target = $region40
      $region39: #{baseline_forward.1} parent=35 // pred_region
        %p206 = scmp.lt.s32.totalorder %s12, 1
        %s207 = scalar_select %p206, %s12, 1
        %s208 = smul.addr %s207, 4
        %s209 = smul.addr %s208, 4
        %s210 = scalar_lea.vmem %s0, %s209
      $region40: #{baseline_forward.1} parent=35 // pred_fallthru
        _
    $region36: #{baseline_forward.1} parent=5 // pred_fallthru
      _
    %p211 = scmp.le.s32.totalorder 1, %s12
    %p212 = scmp.lt.s32.totalorder %s12, 3
    %p213 = pnand %p211, %p212
    %p214 = pneg %p213
    // Predicated region
    $region41: #{baseline_forward.1} parent=5 // pred_check
      _
    $region42: #{baseline_forward.1} parent=5 // pred_check_branch
      %216 = sbr.rel (%p213) target = $region44
    $region43: #{baseline_forward.1} parent=5 // pred_region
      %s217 = ssub.s32 %s12, 1
      %p218 = scmp.lt.s32.totalorder %s17, 1
      %s219 = scalar_select %p218, %s17, 1
      %s220 = smul.addr %s219, 4
      %s221 = smul.addr %s220, 4
      %s222 = scalar_lea.vmem %s0, %s221
      %p223 = pneg %p38
      %p224 = pneg %p35
      %p225 = pneg %p59
      %p226 = pneg %p56
      %p227 = pneg %p80
      %p228 = pneg %p77
      %p229 = pneg %p101
      %p230 = pneg %p98
      %p231 = pneg %p122
      %p232 = pneg %p119
      %p233 = pneg %p143
      %p234 = pneg %p140
      %p235 = pneg %p169
      %p236 = pneg %p166
      %p237 = scmp.lt.s32.totalorder %s17, 1
      %s238 = scalar_select %p237, %s17, 1
      %s239 = smul.addr %s238, 8
      %s240 = scalar_lea.vmem %s6, %s239
      %p241 = scmp.lt.s32.totalorder %s17, 1
      %s242 = scalar_select %p241, %s17, 1
      %s243 = smul.addr %s242, 4
      %s244 = smul.addr %s243, 4
      %s245 = scalar_lea.vmem %s0, %s244
      %p246 = scmp.lt.s32.totalorder %s17, 1
      %s247 = scalar_select %p246, %s17, 1
      %s248 = smul.addr %s247, 8
      %s249 = scalar_lea.vmem %s6, %s248
      %v250 = vld [vmem:[%s1] sm:$0xff]
      %v251 = vld [vmem:[%s245] sm:$0xff]
      %v252 = vld [vmem:[%s245 + $0x8] sm:$0xf]
      %v253 = vld [vmem:[%s245] sm:$0xff]
      %v254 = vld [vmem:[%s245 + $0x8] sm:$0xff]
      %s255 = scalar_lea.vmem %s1, 8
      %v256 = vld [vmem:[%s255] sm:$0xff]
      %v259 = vcombine.high %v253, %v253
      %v260 = vcombine.high %v254, %v254
      %261 = vrot.lane.b32.xlu0 %v253, 127
      %v262 = vpop.permute.xlu0 %261
      %263 = vrot.lane.b32.xlu0 %v259, 127
      %v264 = vpop.permute.xlu0 %263
      %265 = vrot.lane.b32.xlu0 %v254, 127
      %v266 = vpop.permute.xlu0 %265
      %267 = vrot.lane.b32.xlu0 %v260, 127
      %v268 = vpop.permute.xlu0 %267
      %vm269 = vcmask 1039360
      %v270 = vsel %vm269, %v262, %v264
      %v271 = vsel %vm269, %v264, %v266
      %v272 = vsel %vm269, %v266, %v268
      %vm273 = vcmask 31744
      %v275 = vsel %vm273, %v256, 0
      %vm277 = vcmask 1043456
      %v278 = vsel %vm277, %v270, 0
      %v280 = vsel %vm277, %v271, 0
      %v282 = vsel %vm277, %v272, 0
      %284 = vmatprep.subr.mxu0 %v280
      %285 = vmatpush1.msra.mxu0 %v278
      %286 = vmatprep.subr.mxu0 0.0
      %287 = vmatpush1.msra.mxu0 0.0
      %288 = vmatprep.subr.mxu0 0.0
      %289 = vmatpush1.msra.mxu0 0.0
      %290 = vmatprep.subr.mxu0 0.0
      %291 = vmatpush1.msra.mxu0 0.0
      %292 = vmatprep.subr.mxu0 0.0
      %293 = vmatpush1.msra.mxu0 0.0
      %294 = vmatprep.subr.mxu0 0.0
      %295 = vmatpush1.msra.mxu0 0.0
      %296 = vmatprep.subr.mxu0 0.0
      %297 = vmatpush1.msra.mxu0 0.0
      %298 = vmatprep.subr.mxu0 0.0
      %299 = vmatpush1.msra.mxu0 0.0
      %300 = vmatprep.subr.mxu0 0.0
      %301 = vmatpush1.msra.mxu0 0.0
      %302 = vmatprep.subr.mxu0 0.0
      %303 = vmatpush1.msra.mxu0 0.0
      %304 = vmatprep.subr.mxu0 0.0
      %305 = vmatpush1.msra.mxu0 0.0
      %306 = vmatprep.subr.mxu0 0.0
      %307 = vmatpush1.msra.mxu0 0.0
      %308 = vmatprep.subr.mxu0 0.0
      %309 = vmatpush1.msra.mxu0 0.0
      %310 = vmatprep.subr.mxu0 0.0
      %311 = vmatpush1.msra.mxu0 0.0
      %312 = vmatprep.subr.mxu0 0.0
      %313 = vmatpush1.msra.mxu0 0.0
      %314 = vmatprep.subr.mxu0 0.0
      %315 = vmatpush1.msra.mxu0 0.0
      %316 = vmatprep.subr.mxu0 0.0
      %317 = vmatpush1.msra.mxu0 0.0
      %318 = vmatprep.subr.mxu0 0.0
      %319 = vmatpush1.msra.mxu0 0.0
      %320 = vmatprep.subr.mxu0 0.0
      %321 = vmatpush1.msra.mxu0 0.0
      %322 = vmatprep.subr.mxu0 0.0
      %323 = vmatpush1.msra.mxu0 0.0
      %324 = vmatprep.subr.mxu0 0.0
      %325 = vmatpush1.msra.mxu0 0.0
      %326 = vmatprep.subr.mxu0 0.0
      %327 = vmatpush1.msra.mxu0 0.0
      %328 = vmatprep.subr.mxu0 0.0
      %329 = vmatpush1.msra.mxu0 0.0
      %330 = vmatprep.subr.mxu0 0.0
      %331 = vmatpush1.msra.mxu0 0.0
      %332 = vmatprep.subr.mxu0 0.0
      %333 = vmatpush1.msra.mxu0 0.0
      %334 = vmatprep.subr.mxu0 0.0
      %335 = vmatpush1.msra.mxu0 0.0
      %336 = vmatprep.subr.mxu0 0.0
      %337 = vmatpush1.msra.mxu0 0.0
      %338 = vmatprep.subr.mxu0 0.0
      %339 = vmatpush1.msra.mxu0 0.0
      %340 = vmatprep.subr.mxu0 0.0
      %341 = vmatpush1.msra.mxu0 0.0
      %342 = vmatprep.subr.mxu0 0.0
      %343 = vmatpush1.msra.mxu0 0.0
      %344 = vmatprep.subr.mxu0 0.0
      %345 = vmatpush1.msra.mxu0 0.0
      %346 = vmatprep.subr.mxu0 0.0
      %347 = vmatpush1.msra.mxu0 0.0
      %348 = vmatprep.mubr.f32.mxu0 0.0
      %349 = vmatmul.mubr.f32.gmra.mrb[0].mxu0 %v275
      %v350 = vpop.f32.mrb[0].mxu0
      %v351 = vadd.f32 0.0, %v350
      %v352 = vpop.f32.mrb[0].mxu0
      %v353 = vadd.f32 0.0, %v352
      %354 = vdwg.mxu0
      %355 = vmatprep.subr.mxu0 0.0
      %356 = vmatpush1.msra.mxu0 %v282
      %357 = vmatprep.subr.mxu0 0.0
      %358 = vmatpush1.msra.mxu0 0.0
      %359 = vmatprep.subr.mxu0 0.0
      %360 = vmatpush1.msra.mxu0 0.0
      %361 = vmatprep.subr.mxu0 0.0
      %362 = vmatpush1.msra.mxu0 0.0
      %363 = vmatprep.subr.mxu0 0.0
      %364 = vmatpush1.msra.mxu0 0.0
      %365 = vmatprep.subr.mxu0 0.0
      %366 = vmatpush1.msra.mxu0 0.0
      %367 = vmatprep.subr.mxu0 0.0
      %368 = vmatpush1.msra.mxu0 0.0
      %369 = vmatprep.subr.mxu0 0.0
      %370 = vmatpush1.msra.mxu0 0.0
      %371 = vmatprep.subr.mxu0 0.0
      %372 = vmatpush1.msra.mxu0 0.0
      %373 = vmatprep.subr.mxu0 0.0
      %374 = vmatpush1.msra.mxu0 0.0
      %375 = vmatprep.subr.mxu0 0.0
      %376 = vmatpush1.msra.mxu0 0.0
      %377 = vmatprep.subr.mxu0 0.0
      %378 = vmatpush1.msra.mxu0 0.0
      %379 = vmatprep.subr.mxu0 0.0
      %380 = vmatpush1.msra.mxu0 0.0
      %381 = vmatprep.subr.mxu0 0.0
      %382 = vmatpush1.msra.mxu0 0.0
      %383 = vmatprep.subr.mxu0 0.0
      %384 = vmatpush1.msra.mxu0 0.0
      %385 = vmatprep.subr.mxu0 0.0
      %386 = vmatpush1.msra.mxu0 0.0
      %387 = vmatprep.subr.mxu0 0.0
      %388 = vmatpush1.msra.mxu0 0.0
      %389 = vmatprep.subr.mxu0 0.0
      %390 = vmatpush1.msra.mxu0 0.0
      %391 = vmatprep.subr.mxu0 0.0
      %392 = vmatpush1.msra.mxu0 0.0
      %393 = vmatprep.subr.mxu0 0.0
      %394 = vmatpush1.msra.mxu0 0.0
      %395 = vmatprep.subr.mxu0 0.0
      %396 = vmatpush1.msra.mxu0 0.0
      %397 = vmatprep.subr.mxu0 0.0
      %398 = vmatpush1.msra.mxu0 0.0
      %399 = vmatprep.subr.mxu0 0.0
      %400 = vmatpush1.msra.mxu0 0.0
      %401 = vmatprep.subr.mxu0 0.0
      %402 = vmatpush1.msra.mxu0 0.0
      %403 = vmatprep.subr.mxu0 0.0
      %404 = vmatpush1.msra.mxu0 0.0
      %405 = vmatprep.subr.mxu0 0.0
      %406 = vmatpush1.msra.mxu0 0.0
      %407 = vmatprep.subr.mxu0 0.0
      %408 = vmatpush1.msra.mxu0 0.0
      %409 = vmatprep.subr.mxu0 0.0
      %410 = vmatpush1.msra.mxu0 0.0
      %411 = vmatprep.subr.mxu0 0.0
      %412 = vmatpush1.msra.mxu0 0.0
      %413 = vmatprep.subr.mxu0 0.0
      %414 = vmatpush1.msra.mxu0 0.0
      %415 = vmatprep.subr.mxu0 0.0
      %416 = vmatpush1.msra.mxu0 0.0
      %417 = vmatprep.subr.mxu0 0.0
      %418 = vmatpush1.msra.mxu0 0.0
      %419 = vmatprep.mubr.f32.mxu0 0.0
      %420 = vmatmul.mubr.f32.gmra.mrb[0].mxu0 %v275
      %v421 = vpop.f32.mrb[0].mxu0
      %v422 = vadd.f32 0.0, %v421
      %v423 = vpop.f32.mrb[0].mxu0
      %424 = vdwg.mxu0
      %v427 = vcombine.high %v251, %v251
      %v429 = vsel %vm273, %v250, 0
      %v431 = vsel %vm277, %v251, 0
      %v433 = vsel %vm277, %v427, 0
      %v435 = vsel %vm277, %v252, 0
      %437 = vmatprep.subr.mxu0 %v433
      %438 = vmatpush1.msra.mxu0 %v431
      %439 = vmatprep.subr.mxu0 0.0
      %440 = vmatpush1.msra.mxu0 0.0
      %441 = vmatprep.subr.mxu0 0.0
      %442 = vmatpush1.msra.mxu0 0.0
      %443 = vmatprep.subr.mxu0 0.0
      %444 = vmatpush1.msra.mxu0 0.0
      %445 = vmatprep.subr.mxu0 0.0
      %446 = vmatpush1.msra.mxu0 0.0
      %447 = vmatprep.subr.mxu0 0.0
      %448 = vmatpush1.msra.mxu0 0.0
      %449 = vmatprep.subr.mxu0 0.0
      %450 = vmatpush1.msra.mxu0 0.0
      %451 = vmatprep.subr.mxu0 0.0
      %452 = vmatpush1.msra.mxu0 0.0
      %453 = vmatprep.subr.mxu0 0.0
      %454 = vmatpush1.msra.mxu0 0.0
      %455 = vmatprep.subr.mxu0 0.0
      %456 = vmatpush1.msra.mxu0 0.0
      %457 = vmatprep.subr.mxu0 0.0
      %458 = vmatpush1.msra.mxu0 0.0
      %459 = vmatprep.subr.mxu0 0.0
      %460 = vmatpush1.msra.mxu0 0.0
      %461 = vmatprep.subr.mxu0 0.0
      %462 = vmatpush1.msra.mxu0 0.0
      %463 = vmatprep.subr.mxu0 0.0
      %464 = vmatpush1.msra.mxu0 0.0
      %465 = vmatprep.subr.mxu0 0.0
      %466 = vmatpush1.msra.mxu0 0.0
      %467 = vmatprep.subr.mxu0 0.0
      %468 = vmatpush1.msra.mxu0 0.0
      %469 = vmatprep.subr.mxu0 0.0
      %470 = vmatpush1.msra.mxu0 0.0
      %471 = vmatprep.subr.mxu0 0.0
      %472 = vmatpush1.msra.mxu0 0.0
      %473 = vmatprep.subr.mxu0 0.0
      %474 = vmatpush1.msra.mxu0 0.0
      %475 = vmatprep.subr.mxu0 0.0
      %476 = vmatpush1.msra.mxu0 0.0
      %477 = vmatprep.subr.mxu0 0.0
      %478 = vmatpush1.msra.mxu0 0.0
      %479 = vmatprep.subr.mxu0 0.0
      %480 = vmatpush1.msra.mxu0 0.0
      %481 = vmatprep.subr.mxu0 0.0
      %482 = vmatpush1.msra.mxu0 0.0
      %483 = vmatprep.subr.mxu0 0.0
      %484 = vmatpush1.msra.mxu0 0.0
      %485 = vmatprep.subr.mxu0 0.0
      %486 = vmatpush1.msra.mxu0 0.0
      %487 = vmatprep.subr.mxu0 0.0
      %488 = vmatpush1.msra.mxu0 0.0
      %489 = vmatprep.subr.mxu0 0.0
      %490 = vmatpush1.msra.mxu0 0.0
      %491 = vmatprep.subr.mxu0 0.0
      %492 = vmatpush1.msra.mxu0 0.0
      %493 = vmatprep.subr.mxu0 0.0
      %494 = vmatpush1.msra.mxu0 0.0
      %495 = vmatprep.subr.mxu0 0.0
      %496 = vmatpush1.msra.mxu0 0.0
      %497 = vmatprep.subr.mxu0 0.0
      %498 = vmatpush1.msra.mxu0 0.0
      %499 = vmatprep.subr.mxu0 0.0
      %500 = vmatpush1.msra.mxu0 0.0
      %501 = vmatprep.mubr.f32.mxu0 0.0
      %502 = vmatmul.mubr.f32.gmra.mrb[0].mxu0 %v429
      %v503 = vpop.f32.mrb[0].mxu0
      %v504 = vadd.f32 %v351, %v503
      %v505 = vpop.f32.mrb[0].mxu0
      %v506 = vadd.f32 %v353, %v505
      %507 = vdwg.mxu0
      %508 = vmatprep.subr.mxu0 0.0
      %509 = vmatpush1.msra.mxu0 %v435
      %510 = vmatprep.subr.mxu0 0.0
      %511 = vmatpush1.msra.mxu0 0.0
      %512 = vmatprep.subr.mxu0 0.0
      %513 = vmatpush1.msra.mxu0 0.0
      %514 = vmatprep.subr.mxu0 0.0
      %515 = vmatpush1.msra.mxu0 0.0
      %516 = vmatprep.subr.mxu0 0.0
      %517 = vmatpush1.msra.mxu0 0.0
      %518 = vmatprep.subr.mxu0 0.0
      %519 = vmatpush1.msra.mxu0 0.0
      %520 = vmatprep.subr.mxu0 0.0
      %521 = vmatpush1.msra.mxu0 0.0
      %522 = vmatprep.subr.mxu0 0.0
      %523 = vmatpush1.msra.mxu0 0.0
      %524 = vmatprep.subr.mxu0 0.0
      %525 = vmatpush1.msra.mxu0 0.0
      %526 = vmatprep.subr.mxu0 0.0
      %527 = vmatpush1.msra.mxu0 0.0
      %528 = vmatprep.subr.mxu0 0.0
      %529 = vmatpush1.msra.mxu0 0.0
      %530 = vmatprep.subr.mxu0 0.0
      %531 = vmatpush1.msra.mxu0 0.0
      %532 = vmatprep.subr.mxu0 0.0
      %533 = vmatpush1.msra.mxu0 0.0
      %534 = vmatprep.subr.mxu0 0.0
      %535 = vmatpush1.msra.mxu0 0.0
      %536 = vmatprep.subr.mxu0 0.0
      %537 = vmatpush1.msra.mxu0 0.0
      %538 = vmatprep.subr.mxu0 0.0
      %539 = vmatpush1.msra.mxu0 0.0
      %540 = vmatprep.subr.mxu0 0.0
      %541 = vmatpush1.msra.mxu0 0.0
      %542 = vmatprep.subr.mxu0 0.0
      %543 = vmatpush1.msra.mxu0 0.0
      %544 = vmatprep.subr.mxu0 0.0
      %545 = vmatpush1.msra.mxu0 0.0
      %546 = vmatprep.subr.mxu0 0.0
      %547 = vmatpush1.msra.mxu0 0.0
      %548 = vmatprep.subr.mxu0 0.0
      %549 = vmatpush1.msra.mxu0 0.0
      %550 = vmatprep.subr.mxu0 0.0
      %551 = vmatpush1.msra.mxu0 0.0
      %552 = vmatprep.subr.mxu0 0.0
      %553 = vmatpush1.msra.mxu0 0.0
      %554 = vmatprep.subr.mxu0 0.0
      %555 = vmatpush1.msra.mxu0 0.0
      %556 = vmatprep.subr.mxu0 0.0
      %557 = vmatpush1.msra.mxu0 0.0
      %558 = vmatprep.subr.mxu0 0.0
      %559 = vmatpush1.msra.mxu0 0.0
      %560 = vmatprep.subr.mxu0 0.0
      %561 = vmatpush1.msra.mxu0 0.0
      %562 = vmatprep.subr.mxu0 0.0
      %563 = vmatpush1.msra.mxu0 0.0
      %564 = vmatprep.subr.mxu0 0.0
      %565 = vmatpush1.msra.mxu0 0.0
      %566 = vmatprep.subr.mxu0 0.0
      %567 = vmatpush1.msra.mxu0 0.0
      %568 = vmatprep.subr.mxu0 0.0
      %569 = vmatpush1.msra.mxu0 0.0
      %570 = vmatprep.subr.mxu0 0.0
      %571 = vmatpush1.msra.mxu0 0.0
      %572 = vmatprep.mubr.f32.mxu0 0.0
      %573 = vmatmul.mubr.f32.gmra.mrb[0].mxu0 %v429
      %v574 = vpop.f32.mrb[0].mxu0
      %v575 = vadd.f32 %v422, %v574
      %v576 = vpop.f32.mrb[0].mxu0
      %577 = vdwg.mxu0
      %v578 = vld [vmem:[%s245] sm:$0xff]
      %v579 = vld [vmem:[%s245 + $0x8] sm:$0xff]
      %s580 = scalar_lea.vmem %s1, 16
      %v581 = vld [vmem:[%s580] sm:$0xff]
      %v584 = vcombine.high %v578, %v578
      %v585 = vcombine.high %v579, %v579
      %586 = vrot.lane.b32.xlu0 %v578, 126
      %v587 = vpop.permute.xlu0 %586
      %588 = vrot.lane.b32.xlu0 %v584, 126
      %v589 = vpop.permute.xlu0 %588
      %590 = vrot.lane.b32.xlu0 %v579, 126
      %v591 = vpop.permute.xlu0 %590
      %592 = vrot.lane.b32.xlu0 %v585, 126
      %v593 = vpop.permute.xlu0 %592
      %vm594 = vcmask 1031168
      %v595 = vsel %vm594, %v587, %v589
      %v596 = vsel %vm594, %v589, %v591
      %v597 = vsel %vm594, %v591, %v593
      %v599 = vsel %vm273, %v581, 0
      %v601 = vsel %vm277, %v595, 0
      %v603 = vsel %vm277, %v596, 0
      %v605 = vsel %vm277, %v597, 0
      %607 = vmatprep.subr.mxu0 %v603
      %608 = vmatpush1.msra.mxu0 %v601
      %609 = vmatprep.subr.mxu0 0.0
      %610 = vmatpush1.msra.mxu0 0.0
      %611 = vmatprep.subr.mxu0 0.0
      %612 = vmatpush1.msra.mxu0 0.0
      %613 = vmatprep.subr.mxu0 0.0
      %614 = vmatpush1.msra.mxu0 0.0
      %615 = vmatprep.subr.mxu0 0.0
      %616 = vmatpush1.msra.mxu0 0.0
      %617 = vmatprep.subr.mxu0 0.0
      %618 = vmatpush1.msra.mxu0 0.0
      %619 = vmatprep.subr.mxu0 0.0
      %620 = vmatpush1.msra.mxu0 0.0
      %621 = vmatprep.subr.mxu0 0.0
      %622 = vmatpush1.msra.mxu0 0.0
      %623 = vmatprep.subr.mxu0 0.0
      %624 = vmatpush1.msra.mxu0 0.0
      %625 = vmatprep.subr.mxu0 0.0
      %626 = vmatpush1.msra.mxu0 0.0
      %627 = vmatprep.subr.mxu0 0.0
      %628 = vmatpush1.msra.mxu0 0.0
      %629 = vmatprep.subr.mxu0 0.0
      %630 = vmatpush1.msra.mxu0 0.0
      %631 = vmatprep.subr.mxu0 0.0
      %632 = vmatpush1.msra.mxu0 0.0
      %633 = vmatprep.subr.mxu0 0.0
      %634 = vmatpush1.msra.mxu0 0.0
      %635 = vmatprep.subr.mxu0 0.0
      %636 = vmatpush1.msra.mxu0 0.0
      %637 = vmatprep.subr.mxu0 0.0
      %638 = vmatpush1.msra.mxu0 0.0
      %639 = vmatprep.subr.mxu0 0.0
      %640 = vmatpush1.msra.mxu0 0.0
      %641 = vmatprep.subr.mxu0 0.0
      %642 = vmatpush1.msra.mxu0 0.0
      %643 = vmatprep.subr.mxu0 0.0
      %644 = vmatpush1.msra.mxu0 0.0
      %645 = vmatprep.subr.mxu0 0.0
      %646 = vmatpush1.msra.mxu0 0.0
      %647 = vmatprep.subr.mxu0 0.0
      %648 = vmatpush1.msra.mxu0 0.0
      %649 = vmatprep.subr.mxu0 0.0
      %650 = vmatpush1.msra.mxu0 0.0
      %651 = vmatprep.subr.mxu0 0.0
      %652 = vmatpush1.msra.mxu0 0.0
      %653 = vmatprep.subr.mxu0 0.0
      %654 = vmatpush1.msra.mxu0 0.0
      %655 = vmatprep.subr.mxu0 0.0
      %656 = vmatpush1.msra.mxu0 0.0
      %657 = vmatprep.subr.mxu0 0.0
      %658 = vmatpush1.msra.mxu0 0.0
      %659 = vmatprep.subr.mxu0 0.0
      %660 = vmatpush1.msra.mxu0 0.0
      %661 = vmatprep.subr.mxu0 0.0
      %662 = vmatpush1.msra.mxu0 0.0
      %663 = vmatprep.subr.mxu0 0.0
      %664 = vmatpush1.msra.mxu0 0.0
      %665 = vmatprep.subr.mxu0 0.0
      %666 = vmatpush1.msra.mxu0 0.0
      %667 = vmatprep.subr.mxu0 0.0
      %668 = vmatpush1.msra.mxu0 0.0
      %669 = vmatprep.subr.mxu0 0.0
      %670 = vmatpush1.msra.mxu0 0.0
      %671 = vmatprep.mubr.f32.mxu0 0.0
      %672 = vmatmul.mubr.f32.gmra.mrb[0].mxu0 %v599
      %v673 = vpop.f32.mrb[0].mxu0
      %v674 = vadd.f32 0.0, %v673
      %v675 = vpop.f32.mrb[0].mxu0
      %v676 = vadd.f32 0.0, %v675
      %677 = vdwg.mxu0
      %678 = vmatprep.subr.mxu0 0.0
      %679 = vmatpush1.msra.mxu0 %v605
      %680 = vmatprep.subr.mxu0 0.0
      %681 = vmatpush1.msra.mxu0 0.0
      %682 = vmatprep.subr.mxu0 0.0
      %683 = vmatpush1.msra.mxu0 0.0
      %684 = vmatprep.subr.mxu0 0.0
      %685 = vmatpush1.msra.mxu0 0.0
      %686 = vmatprep.subr.mxu0 0.0
      %687 = vmatpush1.msra.mxu0 0.0
      %688 = vmatprep.subr.mxu0 0.0
      %689 = vmatpush1.msra.mxu0 0.0
      %690 = vmatprep.subr.mxu0 0.0
      %691 = vmatpush1.msra.mxu0 0.0
      %692 = vmatprep.subr.mxu0 0.0
      %693 = vmatpush1.msra.mxu0 0.0
      %694 = vmatprep.subr.mxu0 0.0
      %695 = vmatpush1.msra.mxu0 0.0
      %696 = vmatprep.subr.mxu0 0.0
      %697 = vmatpush1.msra.mxu0 0.0
      %698 = vmatprep.subr.mxu0 0.0
      %699 = vmatpush1.msra.mxu0 0.0
      %700 = vmatprep.subr.mxu0 0.0
      %701 = vmatpush1.msra.mxu0 0.0
      %702 = vmatprep.subr.mxu0 0.0
      %703 = vmatpush1.msra.mxu0 0.0
      %704 = vmatprep.subr.mxu0 0.0
      %705 = vmatpush1.msra.mxu0 0.0
      %706 = vmatprep.subr.mxu0 0.0
      %707 = vmatpush1.msra.mxu0 0.0
      %708 = vmatprep.subr.mxu0 0.0
      %709 = vmatpush1.msra.mxu0 0.0
      %710 = vmatprep.subr.mxu0 0.0
      %711 = vmatpush1.msra.mxu0 0.0
      %712 = vmatprep.subr.mxu0 0.0
      %713 = vmatpush1.msra.mxu0 0.0
      %714 = vmatprep.subr.mxu0 0.0
      %715 = vmatpush1.msra.mxu0 0.0
      %716 = vmatprep.subr.mxu0 0.0
      %717 = vmatpush1.msra.mxu0 0.0
      %718 = vmatprep.subr.mxu0 0.0
      %719 = vmatpush1.msra.mxu0 0.0
      %720 = vmatprep.subr.mxu0 0.0
      %721 = vmatpush1.msra.mxu0 0.0
      %722 = vmatprep.subr.mxu0 0.0
      %723 = vmatpush1.msra.mxu0 0.0
      %724 = vmatprep.subr.mxu0 0.0
      %725 = vmatpush1.msra.mxu0 0.0
      %726 = vmatprep.subr.mxu0 0.0
      %727 = vmatpush1.msra.mxu0 0.0
      %728 = vmatprep.subr.mxu0 0.0
      %729 = vmatpush1.msra.mxu0 0.0
      %730 = vmatprep.subr.mxu0 0.0
      %731 = vmatpush1.msra.mxu0 0.0
      %732 = vmatprep.subr.mxu0 0.0
      %733 = vmatpush1.msra.mxu0 0.0
      %734 = vmatprep.subr.mxu0 0.0
      %735 = vmatpush1.msra.mxu0 0.0
      %736 = vmatprep.subr.mxu0 0.0
      %737 = vmatpush1.msra.mxu0 0.0
      %738 = vmatprep.subr.mxu0 0.0
      %739 = vmatpush1.msra.mxu0 0.0
      %740 = vmatprep.subr.mxu0 0.0
      %741 = vmatpush1.msra.mxu0 0.0
      %742 = vmatprep.mubr.f32.mxu0 0.0
      %743 = vmatmul.mubr.f32.gmra.mrb[0].mxu0 %v599
      %v744 = vpop.f32.mrb[0].mxu0
      %v745 = vadd.f32 0.0, %v744
      %v746 = vpop.f32.mrb[0].mxu0
      %747 = vdwg.mxu0
      %v748 = vadd.f32 %v504, %v674
      %v749 = vadd.f32 %v506, %v676
      %v750 = vadd.f32 %v575, %v745
      %v751 = vld [vmem:[%s245] sm:$0xff]
      %v752 = vld [vmem:[%s245 + $0x8] sm:$0xff]
      %s753 = scalar_lea.vmem %s1, 24
      %v754 = vld [vmem:[%s753] sm:$0xff]
      %v757 = vcombine.high %v751, %v751
      %v758 = vcombine.high %v752, %v752
      %759 = vrot.lane.b32.xlu0 %v751, 110
      %v760 = vpop.permute.xlu0 %759
      %761 = vrot.lane.b32.xlu0 %v757, 110
      %v762 = vpop.permute.xlu0 %761
      %763 = vrot.lane.b32.xlu0 %v752, 110
      %v764 = vpop.permute.xlu0 %763
      %765 = vrot.lane.b32.xlu0 %v758, 110
      %v766 = vpop.permute.xlu0 %765
      %vm767 = vcmask 900096
      %v768 = vsel %vm767, %v760, %v762
      %v769 = vsel %vm767, %v762, %v764
      %v770 = vsel %vm767, %v764, %v766
      %v772 = vsel %vm273, %v754, 0
      %v774 = vsel %vm277, %v768, 0
      %v776 = vsel %vm277, %v769, 0
      %v778 = vsel %vm277, %v770, 0
      %780 = vmatprep.subr.mxu0 %v776
      %781 = vmatpush1.msra.mxu0 %v774
      %782 = vmatprep.subr.mxu0 0.0
      %783 = vmatpush1.msra.mxu0 0.0
      %784 = vmatprep.subr.mxu0 0.0
      %785 = vmatpush1.msra.mxu0 0.0
      %786 = vmatprep.subr.mxu0 0.0
      %787 = vmatpush1.msra.mxu0 0.0
      %788 = vmatprep.subr.mxu0 0.0
      %789 = vmatpush1.msra.mxu0 0.0
      %790 = vmatprep.subr.mxu0 0.0
      %791 = vmatpush1.msra.mxu0 0.0
      %792 = vmatprep.subr.mxu0 0.0
      %793 = vmatpush1.msra.mxu0 0.0
      %794 = vmatprep.subr.mxu0 0.0
      %795 = vmatpush1.msra.mxu0 0.0
      %796 = vmatprep.subr.mxu0 0.0
      %797 = vmatpush1.msra.mxu0 0.0
      %798 = vmatprep.subr.mxu0 0.0
      %799 = vmatpush1.msra.mxu0 0.0
      %800 = vmatprep.subr.mxu0 0.0
      %801 = vmatpush1.msra.mxu0 0.0
      %802 = vmatprep.subr.mxu0 0.0
      %803 = vmatpush1.msra.mxu0 0.0
      %804 = vmatprep.subr.mxu0 0.0
      %805 = vmatpush1.msra.mxu0 0.0
      %806 = vmatprep.subr.mxu0 0.0
      %807 = vmatpush1.msra.mxu0 0.0
      %808 = vmatprep.subr.mxu0 0.0
      %809 = vmatpush1.msra.mxu0 0.0
      %810 = vmatprep.subr.mxu0 0.0
      %811 = vmatpush1.msra.mxu0 0.0
      %812 = vmatprep.subr.mxu0 0.0
      %813 = vmatpush1.msra.mxu0 0.0
      %814 = vmatprep.subr.mxu0 0.0
      %815 = vmatpush1.msra.mxu0 0.0
      %816 = vmatprep.subr.mxu0 0.0
      %817 = vmatpush1.msra.mxu0 0.0
      %818 = vmatprep.subr.mxu0 0.0
      %819 = vmatpush1.msra.mxu0 0.0
      %820 = vmatprep.subr.mxu0 0.0
      %821 = vmatpush1.msra.mxu0 0.0
      %822 = vmatprep.subr.mxu0 0.0
      %823 = vmatpush1.msra.mxu0 0.0
      %824 = vmatprep.subr.mxu0 0.0
      %825 = vmatpush1.msra.mxu0 0.0
      %826 = vmatprep.subr.mxu0 0.0
      %827 = vmatpush1.msra.mxu0 0.0
      %828 = vmatprep.subr.mxu0 0.0
      %829 = vmatpush1.msra.mxu0 0.0
      %830 = vmatprep.subr.mxu0 0.0
      %831 = vmatpush1.msra.mxu0 0.0
      %832 = vmatprep.subr.mxu0 0.0
      %833 = vmatpush1.msra.mxu0 0.0
      %834 = vmatprep.subr.mxu0 0.0
      %835 = vmatpush1.msra.mxu0 0.0
      %836 = vmatprep.subr.mxu0 0.0
      %837 = vmatpush1.msra.mxu0 0.0
      %838 = vmatprep.subr.mxu0 0.0
      %839 = vmatpush1.msra.mxu0 0.0
      %840 = vmatprep.subr.mxu0 0.0
      %841 = vmatpush1.msra.mxu0 0.0
      %842 = vmatprep.subr.mxu0 0.0
      %843 = vmatpush1.msra.mxu0 0.0
      %844 = vmatprep.mubr.f32.mxu0 0.0
      %845 = vmatmul.mubr.f32.gmra.mrb[0].mxu0 %v772
      %v846 = vpop.f32.mrb[0].mxu0
      %v847 = vadd.f32 0.0, %v846
      %v848 = vpop.f32.mrb[0].mxu0
      %v849 = vadd.f32 0.0, %v848
      %850 = vdwg.mxu0
      %851 = vmatprep.subr.mxu0 0.0
      %852 = vmatpush1.msra.mxu0 %v778
      %853 = vmatprep.subr.mxu0 0.0
      %854 = vmatpush1.msra.mxu0 0.0
      %855 = vmatprep.subr.mxu0 0.0
      %856 = vmatpush1.msra.mxu0 0.0
      %857 = vmatprep.subr.mxu0 0.0
      %858 = vmatpush1.msra.mxu0 0.0
      %859 = vmatprep.subr.mxu0 0.0
      %860 = vmatpush1.msra.mxu0 0.0
      %861 = vmatprep.subr.mxu0 0.0
      %862 = vmatpush1.msra.mxu0 0.0
      %863 = vmatprep.subr.mxu0 0.0
      %864 = vmatpush1.msra.mxu0 0.0
      %865 = vmatprep.subr.mxu0 0.0
      %866 = vmatpush1.msra.mxu0 0.0
      %867 = vmatprep.subr.mxu0 0.0
      %868 = vmatpush1.msra.mxu0 0.0
      %869 = vmatprep.subr.mxu0 0.0
      %870 = vmatpush1.msra.mxu0 0.0
      %871 = vmatprep.subr.mxu0 0.0
      %872 = vmatpush1.msra.mxu0 0.0
      %873 = vmatprep.subr.mxu0 0.0
      %874 = vmatpush1.msra.mxu0 0.0
      %875 = vmatprep.subr.mxu0 0.0
      %876 = vmatpush1.msra.mxu0 0.0
      %877 = vmatprep.subr.mxu0 0.0
      %878 = vmatpush1.msra.mxu0 0.0
      %879 = vmatprep.subr.mxu0 0.0
      %880 = vmatpush1.msra.mxu0 0.0
      %881 = vmatprep.subr.mxu0 0.0
      %882 = vmatpush1.msra.mxu0 0.0
      %883 = vmatprep.subr.mxu0 0.0
      %884 = vmatpush1.msra.mxu0 0.0
      %885 = vmatprep.subr.mxu0 0.0
      %886 = vmatpush1.msra.mxu0 0.0
      %887 = vmatprep.subr.mxu0 0.0
      %888 = vmatpush1.msra.mxu0 0.0
      %889 = vmatprep.subr.mxu0 0.0
      %890 = vmatpush1.msra.mxu0 0.0
      %891 = vmatprep.subr.mxu0 0.0
      %892 = vmatpush1.msra.mxu0 0.0
      %893 = vmatprep.subr.mxu0 0.0
      %894 = vmatpush1.msra.mxu0 0.0
      %895 = vmatprep.subr.mxu0 0.0
      %896 = vmatpush1.msra.mxu0 0.0
      %897 = vmatprep.subr.mxu0 0.0
      %898 = vmatpush1.msra.mxu0 0.0
      %899 = vmatprep.subr.mxu0 0.0
      %900 = vmatpush1.msra.mxu0 0.0
      %901 = vmatprep.subr.mxu0 0.0
      %902 = vmatpush1.msra.mxu0 0.0
      %903 = vmatprep.subr.mxu0 0.0
      %904 = vmatpush1.msra.mxu0 0.0
      %905 = vmatprep.subr.mxu0 0.0
      %906 = vmatpush1.msra.mxu0 0.0
      %907 = vmatprep.subr.mxu0 0.0
      %908 = vmatpush1.msra.mxu0 0.0
      %909 = vmatprep.subr.mxu0 0.0
      %910 = vmatpush1.msra.mxu0 0.0
      %911 = vmatprep.subr.mxu0 0.0
      %912 = vmatpush1.msra.mxu0 0.0
      %913 = vmatprep.subr.mxu0 0.0
      %914 = vmatpush1.msra.mxu0 0.0
      %915 = vmatprep.mubr.f32.mxu0 0.0
      %916 = vmatmul.mubr.f32.gmra.mrb[0].mxu0 %v772
      %v917 = vpop.f32.mrb[0].mxu0
      %v918 = vadd.f32 0.0, %v917
      %v919 = vpop.f32.mrb[0].mxu0
      %920 = vdwg.mxu0
      %v921 = vadd.f32 %v748, %v847
      %v922 = vadd.f32 %v749, %v849
      %v923 = vadd.f32 %v750, %v918
      %v924 = vld [vmem:[%s245] sm:$0xff]
      %v925 = vld [vmem:[%s245 + $0x8] sm:$0xff]
      %s926 = scalar_lea.vmem %s1, 32
      %v927 = vld [vmem:[%s926] sm:$0xff]
      %v930 = vcombine.high %v924, %v924
      %v931 = vcombine.high %v925, %v925
      %932 = vrot.lane.b32.xlu0 %v924, 109
      %v933 = vpop.permute.xlu0 %932
      %934 = vrot.lane.b32.xlu0 %v930, 109
      %v935 = vpop.permute.xlu0 %934
      %936 = vrot.lane.b32.xlu0 %v925, 109
      %v937 = vpop.permute.xlu0 %936
      %938 = vrot.lane.b32.xlu0 %v931, 109
      %v939 = vpop.permute.xlu0 %938
      %vm940 = vcmask 891904
      %v941 = vsel %vm940, %v933, %v935
      %v942 = vsel %vm940, %v935, %v937
      %v943 = vsel %vm940, %v937, %v939
      %v945 = vsel %vm273, %v927, 0
      %v947 = vsel %vm277, %v941, 0
      %v949 = vsel %vm277, %v942, 0
      %v951 = vsel %vm277, %v943, 0
      %953 = vmatprep.subr.mxu0 %v949
      %954 = vmatpush1.msra.mxu0 %v947
      %955 = vmatprep.subr.mxu0 0.0
      %956 = vmatpush1.msra.mxu0 0.0
      %957 = vmatprep.subr.mxu0 0.0
      %958 = vmatpush1.msra.mxu0 0.0
      %959 = vmatprep.subr.mxu0 0.0
      %960 = vmatpush1.msra.mxu0 0.0
      %961 = vmatprep.subr.mxu0 0.0
      %962 = vmatpush1.msra.mxu0 0.0
      %963 = vmatprep.subr.mxu0 0.0
      %964 = vmatpush1.msra.mxu0 0.0
      %965 = vmatprep.subr.mxu0 0.0
      %966 = vmatpush1.msra.mxu0 0.0
      %967 = vmatprep.subr.mxu0 0.0
      %968 = vmatpush1.msra.mxu0 0.0
      %969 = vmatprep.subr.mxu0 0.0
      %970 = vmatpush1.msra.mxu0 0.0
      %971 = vmatprep.subr.mxu0 0.0
      %972 = vmatpush1.msra.mxu0 0.0
      %973 = vmatprep.subr.mxu0 0.0
      %974 = vmatpush1.msra.mxu0 0.0
      %975 = vmatprep.subr.mxu0 0.0
      %976 = vmatpush1.msra.mxu0 0.0
      %977 = vmatprep.subr.mxu0 0.0
      %978 = vmatpush1.msra.mxu0 0.0
      %979 = vmatprep.subr.mxu0 0.0
      %980 = vmatpush1.msra.mxu0 0.0
      %981 = vmatprep.subr.mxu0 0.0
      %982 = vmatpush1.msra.mxu0 0.0
      %983 = vmatprep.subr.mxu0 0.0
      %984 = vmatpush1.msra.mxu0 0.0
      %985 = vmatprep.subr.mxu0 0.0
      %986 = vmatpush1.msra.mxu0 0.0
      %987 = vmatprep.subr.mxu0 0.0
      %988 = vmatpush1.msra.mxu0 0.0
      %989 = vmatprep.subr.mxu0 0.0
      %990 = vmatpush1.msra.mxu0 0.0
      %991 = vmatprep.subr.mxu0 0.0
      %992 = vmatpush1.msra.mxu0 0.0
      %993 = vmatprep.subr.mxu0 0.0
      %994 = vmatpush1.msra.mxu0 0.0
      %995 = vmatprep.subr.mxu0 0.0
      %996 = vmatpush1.msra.mxu0 0.0
      %997 = vmatprep.subr.mxu0 0.0
      %998 = vmatpush1.msra.mxu0 0.0
      %999 = vmatprep.subr.mxu0 0.0
      %1000 = vmatpush1.msra.mxu0 0.0
      %1001 = vmatprep.subr.mxu0 0.0
      %1002 = vmatpush1.msra.mxu0 0.0
      %1003 = vmatprep.subr.mxu0 0.0
      %1004 = vmatpush1.msra.mxu0 0.0
      %1005 = vmatprep.subr.mxu0 0.0
      %1006 = vmatpush1.msra.mxu0 0.0
      %1007 = vmatprep.subr.mxu0 0.0
      %1008 = vmatpush1.msra.mxu0 0.0
      %1009 = vmatprep.subr.mxu0 0.0
      %1010 = vmatpush1.msra.mxu0 0.0
      %1011 = vmatprep.subr.mxu0 0.0
      %1012 = vmatpush1.msra.mxu0 0.0
      %1013 = vmatprep.subr.mxu0 0.0
      %1014 = vmatpush1.msra.mxu0 0.0
      %1015 = vmatprep.subr.mxu0 0.0
      %1016 = vmatpush1.msra.mxu0 0.0
      %1017 = vmatprep.mubr.f32.mxu0 0.0
      %1018 = vmatmul.mubr.f32.gmra.mrb[0].mxu0 %v945
      %v1019 = vpop.f32.mrb[0].mxu0
      %v1020 = vadd.f32 0.0, %v1019
      %v1021 = vpop.f32.mrb[0].mxu0
      %v1022 = vadd.f32 0.0, %v1021
      %1023 = vdwg.mxu0
      %1024 = vmatprep.subr.mxu0 0.0
      %1025 = vmatpush1.msra.mxu0 %v951
      %1026 = vmatprep.subr.mxu0 0.0
      %1027 = vmatpush1.msra.mxu0 0.0
      %1028 = vmatprep.subr.mxu0 0.0
      %1029 = vmatpush1.msra.mxu0 0.0
      %1030 = vmatprep.subr.mxu0 0.0
      %1031 = vmatpush1.msra.mxu0 0.0
      %1032 = vmatprep.subr.mxu0 0.0
      %1033 = vmatpush1.msra.mxu0 0.0
      %1034 = vmatprep.subr.mxu0 0.0
      %1035 = vmatpush1.msra.mxu0 0.0
      %1036 = vmatprep.subr.mxu0 0.0
      %1037 = vmatpush1.msra.mxu0 0.0
      %1038 = vmatprep.subr.mxu0 0.0
      %1039 = vmatpush1.msra.mxu0 0.0
      %1040 = vmatprep.subr.mxu0 0.0
      %1041 = vmatpush1.msra.mxu0 0.0
      %1042 = vmatprep.subr.mxu0 0.0
      %1043 = vmatpush1.msra.mxu0 0.0
      %1044 = vmatprep.subr.mxu0 0.0
      %1045 = vmatpush1.msra.mxu0 0.0
      %1046 = vmatprep.subr.mxu0 0.0
      %1047 = vmatpush1.msra.mxu0 0.0
      %1048 = vmatprep.subr.mxu0 0.0
      %1049 = vmatpush1.msra.mxu0 0.0
      %1050 = vmatprep.subr.mxu0 0.0
      %1051 = vmatpush1.msra.mxu0 0.0
      %1052 = vmatprep.subr.mxu0 0.0
      %1053 = vmatpush1.msra.mxu0 0.0
      %1054 = vmatprep.subr.mxu0 0.0
      %1055 = vmatpush1.msra.mxu0 0.0
      %1056 = vmatprep.subr.mxu0 0.0
      %1057 = vmatpush1.msra.mxu0 0.0
      %1058 = vmatprep.subr.mxu0 0.0
      %1059 = vmatpush1.msra.mxu0 0.0
      %1060 = vmatprep.subr.mxu0 0.0
      %1061 = vmatpush1.msra.mxu0 0.0
      %1062 = vmatprep.subr.mxu0 0.0
      %1063 = vmatpush1.msra.mxu0 0.0
      %1064 = vmatprep.subr.mxu0 0.0
      %1065 = vmatpush1.msra.mxu0 0.0
      %1066 = vmatprep.subr.mxu0 0.0
      %1067 = vmatpush1.msra.mxu0 0.0
      %1068 = vmatprep.subr.mxu0 0.0
      %1069 = vmatpush1.msra.mxu0 0.0
      %1070 = vmatprep.subr.mxu0 0.0
      %1071 = vmatpush1.msra.mxu0 0.0
      %1072 = vmatprep.subr.mxu0 0.0
      %1073 = vmatpush1.msra.mxu0 0.0
      %1074 = vmatprep.subr.mxu0 0.0
      %1075 = vmatpush1.msra.mxu0 0.0
      %1076 = vmatprep.subr.mxu0 0.0
      %1077 = vmatpush1.msra.mxu0 0.0
      %1078 = vmatprep.subr.mxu0 0.0
      %1079 = vmatpush1.msra.mxu0 0.0
      %1080 = vmatprep.subr.mxu0 0.0
      %1081 = vmatpush1.msra.mxu0 0.0
      %1082 = vmatprep.subr.mxu0 0.0
      %1083 = vmatpush1.msra.mxu0 0.0
      %1084 = vmatprep.subr.mxu0 0.0
      %1085 = vmatpush1.msra.mxu0 0.0
      %1086 = vmatprep.subr.mxu0 0.0
      %1087 = vmatpush1.msra.mxu0 0.0
      %1088 = vmatprep.mubr.f32.mxu0 0.0
      %1089 = vmatmul.mubr.f32.gmra.mrb[0].mxu0 %v945
      %v1090 = vpop.f32.mrb[0].mxu0
      %v1091 = vadd.f32 0.0, %v1090
      %v1092 = vpop.f32.mrb[0].mxu0
      %1093 = vdwg.mxu0
      %v1094 = vadd.f32 %v921, %v1020
      %v1095 = vadd.f32 %v922, %v1022
      %v1096 = vadd.f32 %v923, %v1091
      %v1097 = vld [vmem:[%s245] sm:$0xff]
      %v1098 = vld [vmem:[%s245 + $0x8] sm:$0xff]
      %s1099 = scalar_lea.vmem %s1, 40
      %v1100 = vld [vmem:[%s1099] sm:$0xff]
      %v1103 = vcombine.high %v1097, %v1097
      %v1104 = vcombine.high %v1098, %v1098
      %1105 = vrot.lane.b32.xlu0 %v1097, 108
      %v1106 = vpop.permute.xlu0 %1105
      %1107 = vrot.lane.b32.xlu0 %v1103, 108
      %v1108 = vpop.permute.xlu0 %1107
      %1109 = vrot.lane.b32.xlu0 %v1098, 108
      %v1110 = vpop.permute.xlu0 %1109
      %1111 = vrot.lane.b32.xlu0 %v1104, 108
      %v1112 = vpop.permute.xlu0 %1111
      %vm1113 = vcmask 883712
      %v1114 = vsel %vm1113, %v1106, %v1108
      %v1115 = vsel %vm1113, %v1108, %v1110
      %v1116 = vsel %vm1113, %v1110, %v1112
      %v1118 = vsel %vm273, %v1100, 0
      %v1120 = vsel %vm277, %v1114, 0
      %v1122 = vsel %vm277, %v1115, 0
      %v1124 = vsel %vm277, %v1116, 0
      %1126 = vmatprep.subr.mxu0 %v1122
      %1127 = vmatpush1.msra.mxu0 %v1120
      %1128 = vmatprep.subr.mxu0 0.0
      %1129 = vmatpush1.msra.mxu0 0.0
      %1130 = vmatprep.subr.mxu0 0.0
      %1131 = vmatpush1.msra.mxu0 0.0
      %1132 = vmatprep.subr.mxu0 0.0
      %1133 = vmatpush1.msra.mxu0 0.0
      %1134 = vmatprep.subr.mxu0 0.0
      %1135 = vmatpush1.msra.mxu0 0.0
      %1136 = vmatprep.subr.mxu0 0.0
      %1137 = vmatpush1.msra.mxu0 0.0
      %1138 = vmatprep.subr.mxu0 0.0
      %1139 = vmatpush1.msra.mxu0 0.0
      %1140 = vmatprep.subr.mxu0 0.0
      %1141 = vmatpush1.msra.mxu0 0.0
      %1142 = vmatprep.subr.mxu0 0.0
      %1143 = vmatpush1.msra.mxu0 0.0
      %1144 = vmatprep.subr.mxu0 0.0
      %1145 = vmatpush1.msra.mxu0 0.0
      %1146 = vmatprep.subr.mxu0 0.0
      %1147 = vmatpush1.msra.mxu0 0.0
      %1148 = vmatprep.subr.mxu0 0.0
      %1149 = vmatpush1.msra.mxu0 0.0
      %1150 = vmatprep.subr.mxu0 0.0
      %1151 = vmatpush1.msra.mxu0 0.0
      %1152 = vmatprep.subr.mxu0 0.0
      %1153 = vmatpush1.msra.mxu0 0.0
      %1154 = vmatprep.subr.mxu0 0.0
      %1155 = vmatpush1.msra.mxu0 0.0
      %1156 = vmatprep.subr.mxu0 0.0
      %1157 = vmatpush1.msra.mxu0 0.0
      %1158 = vmatprep.subr.mxu0 0.0
      %1159 = vmatpush1.msra.mxu0 0.0
      %1160 = vmatprep.subr.mxu0 0.0
      %1161 = vmatpush1.msra.mxu0 0.0
      %1162 = vmatprep.subr.mxu0 0.0
      %1163 = vmatpush1.msra.mxu0 0.0
      %1164 = vmatprep.subr.mxu0 0.0
      %1165 = vmatpush1.msra.mxu0 0.0
      %1166 = vmatprep.subr.mxu0 0.0
      %1167 = vmatpush1.msra.mxu0 0.0
      %1168 = vmatprep.subr.mxu0 0.0
      %1169 = vmatpush1.msra.mxu0 0.0
      %1170 = vmatprep.subr.mxu0 0.0
      %1171 = vmatpush1.msra.mxu0 0.0
      %1172 = vmatprep.subr.mxu0 0.0
      %1173 = vmatpush1.msra.mxu0 0.0
      %1174 = vmatprep.subr.mxu0 0.0
      %1175 = vmatpush1.msra.mxu0 0.0
      %1176 = vmatprep.subr.mxu0 0.0
      %1177 = vmatpush1.msra.mxu0 0.0
      %1178 = vmatprep.subr.mxu0 0.0
      %1179 = vmatpush1.msra.mxu0 0.0
      %1180 = vmatprep.subr.mxu0 0.0
      %1181 = vmatpush1.msra.mxu0 0.0
      %1182 = vmatprep.subr.mxu0 0.0
      %1183 = vmatpush1.msra.mxu0 0.0
      %1184 = vmatprep.subr.mxu0 0.0
      %1185 = vmatpush1.msra.mxu0 0.0
      %1186 = vmatprep.subr.mxu0 0.0
      %1187 = vmatpush1.msra.mxu0 0.0
      %1188 = vmatprep.subr.mxu0 0.0
      %1189 = vmatpush1.msra.mxu0 0.0
      %1190 = vmatprep.mubr.f32.mxu0 0.0
      %1191 = vmatmul.mubr.f32.gmra.mrb[0].mxu0 %v1118
      %v1192 = vpop.f32.mrb[0].mxu0
      %v1193 = vadd.f32 0.0, %v1192
      %v1194 = vpop.f32.mrb[0].mxu0
      %v1195 = vadd.f32 0.0, %v1194
      %1196 = vdwg.mxu0
      %1197 = vmatprep.subr.mxu0 0.0
      %1198 = vmatpush1.msra.mxu0 %v1124
      %1199 = vmatprep.subr.mxu0 0.0
      %1200 = vmatpush1.msra.mxu0 0.0
      %1201 = vmatprep.subr.mxu0 0.0
      %1202 = vmatpush1.msra.mxu0 0.0
      %1203 = vmatprep.subr.mxu0 0.0
      %1204 = vmatpush1.msra.mxu0 0.0
      %1205 = vmatprep.subr.mxu0 0.0
      %1206 = vmatpush1.msra.mxu0 0.0
      %1207 = vmatprep.subr.mxu0 0.0
      %1208 = vmatpush1.msra.mxu0 0.0
      %1209 = vmatprep.subr.mxu0 0.0
      %1210 = vmatpush1.msra.mxu0 0.0
      %1211 = vmatprep.subr.mxu0 0.0
      %1212 = vmatpush1.msra.mxu0 0.0
      %1213 = vmatprep.subr.mxu0 0.0
      %1214 = vmatpush1.msra.mxu0 0.0
      %1215 = vmatprep.subr.mxu0 0.0
      %1216 = vmatpush1.msra.mxu0 0.0
      %1217 = vmatprep.subr.mxu0 0.0
      %1218 = vmatpush1.msra.mxu0 0.0
      %1219 = vmatprep.subr.mxu0 0.0
      %1220 = vmatpush1.msra.mxu0 0.0
      %1221 = vmatprep.subr.mxu0 0.0
      %1222 = vmatpush1.msra.mxu0 0.0
      %1223 = vmatprep.subr.mxu0 0.0
      %1224 = vmatpush1.msra.mxu0 0.0
      %1225 = vmatprep.subr.mxu0 0.0
      %1226 = vmatpush1.msra.mxu0 0.0
      %1227 = vmatprep.subr.mxu0 0.0
      %1228 = vmatpush1.msra.mxu0 0.0
      %1229 = vmatprep.subr.mxu0 0.0
      %1230 = vmatpush1.msra.mxu0 0.0
      %1231 = vmatprep.subr.mxu0 0.0
      %1232 = vmatpush1.msra.mxu0 0.0
      %1233 = vmatprep.subr.mxu0 0.0
      %1234 = vmatpush1.msra.mxu0 0.0
      %1235 = vmatprep.subr.mxu0 0.0
      %1236 = vmatpush1.msra.mxu0 0.0
      %1237 = vmatprep.subr.mxu0 0.0
      %1238 = vmatpush1.msra.mxu0 0.0
      %1239 = vmatprep.subr.mxu0 0.0
      %1240 = vmatpush1.msra.mxu0 0.0
      %1241 = vmatprep.subr.mxu0 0.0
      %1242 = vmatpush1.msra.mxu0 0.0
      %1243 = vmatprep.subr.mxu0 0.0
      %1244 = vmatpush1.msra.mxu0 0.0
      %1245 = vmatprep.subr.mxu0 0.0
      %1246 = vmatpush1.msra.mxu0 0.0
      %1247 = vmatprep.subr.mxu0 0.0
      %1248 = vmatpush1.msra.mxu0 0.0
      %1249 = vmatprep.subr.mxu0 0.0
      %1250 = vmatpush1.msra.mxu0 0.0
      %1251 = vmatprep.subr.mxu0 0.0
      %1252 = vmatpush1.msra.mxu0 0.0
      %1253 = vmatprep.subr.mxu0 0.0
      %1254 = vmatpush1.msra.mxu0 0.0
      %1255 = vmatprep.subr.mxu0 0.0
      %1256 = vmatpush1.msra.mxu0 0.0
      %1257 = vmatprep.subr.mxu0 0.0
      %1258 = vmatpush1.msra.mxu0 0.0
      %1259 = vmatprep.subr.mxu0 0.0
      %1260 = vmatpush1.msra.mxu0 0.0
      %1261 = vmatprep.mubr.f32.mxu0 0.0
      %1262 = vmatmul.mubr.f32.gmra.mrb[0].mxu0 %v1118
      %v1263 = vpop.f32.mrb[0].mxu0
      %v1264 = vadd.f32 0.0, %v1263
      %v1265 = vpop.f32.mrb[0].mxu0
      %1266 = vdwg.mxu0
      %v1267 = vadd.f32 %v1094, %v1193
      %v1268 = vadd.f32 %v1095, %v1195
      %v1269 = vadd.f32 %v1096, %v1264
      %v1270 = vld [vmem:[%s245] sm:$0xff]
      %v1271 = vld [vmem:[%s245 + $0x8] sm:$0xff]
      %s1272 = scalar_lea.vmem %s1, 48
      %v1273 = vld [vmem:[%s1272] sm:$0xff]
      %v1276 = vcombine.high %v1270, %v1270
      %v1277 = vcombine.high %v1271, %v1271
      %1278 = vrot.lane.b32.xlu0 %v1270, 92
      %v1279 = vpop.permute.xlu0 %1278
      %1280 = vrot.lane.b32.xlu0 %v1276, 92
      %v1281 = vpop.permute.xlu0 %1280
      %1282 = vrot.lane.b32.xlu0 %v1271, 92
      %v1283 = vpop.permute.xlu0 %1282
      %1284 = vrot.lane.b32.xlu0 %v1277, 92
      %v1285 = vpop.permute.xlu0 %1284
      %vm1286 = vcmask 752640
      %v1287 = vsel %vm1286, %v1279, %v1281
      %v1288 = vsel %vm1286, %v1281, %v1283
      %v1289 = vsel %vm1286, %v1283, %v1285
      %v1291 = vsel %vm273, %v1273, 0
      %v1293 = vsel %vm277, %v1287, 0
      %v1295 = vsel %vm277, %v1288, 0
      %v1297 = vsel %vm277, %v1289, 0
      %1299 = vmatprep.subr.mxu0 %v1295
      %1300 = vmatpush1.msra.mxu0 %v1293
      %1301 = vmatprep.subr.mxu0 0.0
      %1302 = vmatpush1.msra.mxu0 0.0
      %1303 = vmatprep.subr.mxu0 0.0
      %1304 = vmatpush1.msra.mxu0 0.0
      %1305 = vmatprep.subr.mxu0 0.0
      %1306 = vmatpush1.msra.mxu0 0.0
      %1307 = vmatprep.subr.mxu0 0.0
      %1308 = vmatpush1.msra.mxu0 0.0
      %1309 = vmatprep.subr.mxu0 0.0
      %1310 = vmatpush1.msra.mxu0 0.0
      %1311 = vmatprep.subr.mxu0 0.0
      %1312 = vmatpush1.msra.mxu0 0.0
      %1313 = vmatprep.subr.mxu0 0.0
      %1314 = vmatpush1.msra.mxu0 0.0
      %1315 = vmatprep.subr.mxu0 0.0
      %1316 = vmatpush1.msra.mxu0 0.0
      %1317 = vmatprep.subr.mxu0 0.0
      %1318 = vmatpush1.msra.mxu0 0.0
      %1319 = vmatprep.subr.mxu0 0.0
      %1320 = vmatpush1.msra.mxu0 0.0
      %1321 = vmatprep.subr.mxu0 0.0
      %1322 = vmatpush1.msra.mxu0 0.0
      %1323 = vmatprep.subr.mxu0 0.0
      %1324 = vmatpush1.msra.mxu0 0.0
      %1325 = vmatprep.subr.mxu0 0.0
      %1326 = vmatpush1.msra.mxu0 0.0
      %1327 = vmatprep.subr.mxu0 0.0
      %1328 = vmatpush1.msra.mxu0 0.0
      %1329 = vmatprep.subr.mxu0 0.0
      %1330 = vmatpush1.msra.mxu0 0.0
      %1331 = vmatprep.subr.mxu0 0.0
      %1332 = vmatpush1.msra.mxu0 0.0
      %1333 = vmatprep.subr.mxu0 0.0
      %1334 = vmatpush1.msra.mxu0 0.0
      %1335 = vmatprep.subr.mxu0 0.0
      %1336 = vmatpush1.msra.mxu0 0.0
      %1337 = vmatprep.subr.mxu0 0.0
      %1338 = vmatpush1.msra.mxu0 0.0
      %1339 = vmatprep.subr.mxu0 0.0
      %1340 = vmatpush1.msra.mxu0 0.0
      %1341 = vmatprep.subr.mxu0 0.0
      %1342 = vmatpush1.msra.mxu0 0.0
      %1343 = vmatprep.subr.mxu0 0.0
      %1344 = vmatpush1.msra.mxu0 0.0
      %1345 = vmatprep.subr.mxu0 0.0
      %1346 = vmatpush1.msra.mxu0 0.0
      %1347 = vmatprep.subr.mxu0 0.0
      %1348 = vmatpush1.msra.mxu0 0.0
      %1349 = vmatprep.subr.mxu0 0.0
      %1350 = vmatpush1.msra.mxu0 0.0
      %1351 = vmatprep.subr.mxu0 0.0
      %1352 = vmatpush1.msra.mxu0 0.0
      %1353 = vmatprep.subr.mxu0 0.0
      %1354 = vmatpush1.msra.mxu0 0.0
      %1355 = vmatprep.subr.mxu0 0.0
      %1356 = vmatpush1.msra.mxu0 0.0
      %1357 = vmatprep.subr.mxu0 0.0
      %1358 = vmatpush1.msra.mxu0 0.0
      %1359 = vmatprep.subr.mxu0 0.0
      %1360 = vmatpush1.msra.mxu0 0.0
      %1361 = vmatprep.subr.mxu0 0.0
      %1362 = vmatpush1.msra.mxu0 0.0
      %1363 = vmatprep.mubr.f32.mxu0 0.0
      %1364 = vmatmul.mubr.f32.gmra.mrb[0].mxu0 %v1291
      %v1365 = vpop.f32.mrb[0].mxu0
      %v1366 = vadd.f32 0.0, %v1365
      %v1367 = vpop.f32.mrb[0].mxu0
      %v1368 = vadd.f32 0.0, %v1367
      %1369 = vdwg.mxu0
      %1370 = vmatprep.subr.mxu0 0.0
      %1371 = vmatpush1.msra.mxu0 %v1297
      %1372 = vmatprep.subr.mxu0 0.0
      %1373 = vmatpush1.msra.mxu0 0.0
      %1374 = vmatprep.subr.mxu0 0.0
      %1375 = vmatpush1.msra.mxu0 0.0
      %1376 = vmatprep.subr.mxu0 0.0
      %1377 = vmatpush1.msra.mxu0 0.0
      %1378 = vmatprep.subr.mxu0 0.0
      %1379 = vmatpush1.msra.mxu0 0.0
      %1380 = vmatprep.subr.mxu0 0.0
      %1381 = vmatpush1.msra.mxu0 0.0
      %1382 = vmatprep.subr.mxu0 0.0
      %1383 = vmatpush1.msra.mxu0 0.0
      %1384 = vmatprep.subr.mxu0 0.0
      %1385 = vmatpush1.msra.mxu0 0.0
      %1386 = vmatprep.subr.mxu0 0.0
      %1387 = vmatpush1.msra.mxu0 0.0
      %1388 = vmatprep.subr.mxu0 0.0
      %1389 = vmatpush1.msra.mxu0 0.0
      %1390 = vmatprep.subr.mxu0 0.0
      %1391 = vmatpush1.msra.mxu0 0.0
      %1392 = vmatprep.subr.mxu0 0.0
      %1393 = vmatpush1.msra.mxu0 0.0
      %1394 = vmatprep.subr.mxu0 0.0
      %1395 = vmatpush1.msra.mxu0 0.0
      %1396 = vmatprep.subr.mxu0 0.0
      %1397 = vmatpush1.msra.mxu0 0.0
      %1398 = vmatprep.subr.mxu0 0.0
      %1399 = vmatpush1.msra.mxu0 0.0
      %1400 = vmatprep.subr.mxu0 0.0
      %1401 = vmatpush1.msra.mxu0 0.0
      %1402 = vmatprep.subr.mxu0 0.0
      %1403 = vmatpush1.msra.mxu0 0.0
      %1404 = vmatprep.subr.mxu0 0.0
      %1405 = vmatpush1.msra.mxu0 0.0
      %1406 = vmatprep.subr.mxu0 0.0
      %1407 = vmatpush1.msra.mxu0 0.0
      %1408 = vmatprep.subr.mxu0 0.0
      %1409 = vmatpush1.msra.mxu0 0.0
      %1410 = vmatprep.subr.mxu0 0.0
      %1411 = vmatpush1.msra.mxu0 0.0
      %1412 = vmatprep.subr.mxu0 0.0
      %1413 = vmatpush1.msra.mxu0 0.0
      %1414 = vmatprep.subr.mxu0 0.0
      %1415 = vmatpush1.msra.mxu0 0.0
      %1416 = vmatprep.subr.mxu0 0.0
      %1417 = vmatpush1.msra.mxu0 0.0
      %1418 = vmatprep.subr.mxu0 0.0
      %1419 = vmatpush1.msra.mxu0 0.0
      %1420 = vmatprep.subr.mxu0 0.0
      %1421 = vmatpush1.msra.mxu0 0.0
      %1422 = vmatprep.subr.mxu0 0.0
      %1423 = vmatpush1.msra.mxu0 0.0
      %1424 = vmatprep.subr.mxu0 0.0
      %1425 = vmatpush1.msra.mxu0 0.0
      %1426 = vmatprep.subr.mxu0 0.0
      %1427 = vmatpush1.msra.mxu0 0.0
      %1428 = vmatprep.subr.mxu0 0.0
      %1429 = vmatpush1.msra.mxu0 0.0
      %1430 = vmatprep.subr.mxu0 0.0
      %1431 = vmatpush1.msra.mxu0 0.0
      %1432 = vmatprep.subr.mxu0 0.0
      %1433 = vmatpush1.msra.mxu0 0.0
      %1434 = vmatprep.mubr.f32.mxu0 0.0
      %1435 = vmatmul.mubr.f32.gmra.mrb[0].mxu0 %v1291
      %v1436 = vpop.f32.mrb[0].mxu0
      %v1437 = vadd.f32 0.0, %v1436
      %v1438 = vpop.f32.mrb[0].mxu0
      %1439 = vdwg.mxu0
      %v1440 = vadd.f32 %v1267, %v1366
      %v1441 = vadd.f32 %v1268, %v1368
      %v1442 = vadd.f32 %v1269, %v1437
      %v1443 = vld [vmem:[%s245] sm:$0xff]
      %v1444 = vld [vmem:[%s245 + $0x8] sm:$0xff]
      %s1445 = scalar_lea.vmem %s1, 56
      %v1446 = vld [vmem:[%s1445] sm:$0xff]
      %v1449 = vcombine.high %v1443, %v1443
      %v1450 = vcombine.high %v1444, %v1444
      %1451 = vrot.lane.b32.xlu0 %v1443, 91
      %v1452 = vpop.permute.xlu0 %1451
      %1453 = vrot.lane.b32.xlu0 %v1449, 91
      %v1454 = vpop.permute.xlu0 %1453
      %1455 = vrot.lane.b32.xlu0 %v1444, 91
      %v1456 = vpop.permute.xlu0 %1455
      %1457 = vrot.lane.b32.xlu0 %v1450, 91
      %v1458 = vpop.permute.xlu0 %1457
      %vm1459 = vcmask 744448
      %v1460 = vsel %vm1459, %v1452, %v1454
      %v1461 = vsel %vm1459, %v1454, %v1456
      %v1462 = vsel %vm1459, %v1456, %v1458
      %v1464 = vsel %vm273, %v1446, 0
      %v1466 = vsel %vm277, %v1460, 0
      %v1468 = vsel %vm277, %v1461, 0
      %v1470 = vsel %vm277, %v1462, 0
      %1472 = vmatprep.subr.mxu0 %v1468
      %1473 = vmatpush1.msra.mxu0 %v1466
      %1474 = vmatprep.subr.mxu0 0.0
      %1475 = vmatpush1.msra.mxu0 0.0
      %1476 = vmatprep.subr.mxu0 0.0
      %1477 = vmatpush1.msra.mxu0 0.0
      %1478 = vmatprep.subr.mxu0 0.0
      %1479 = vmatpush1.msra.mxu0 0.0
      %1480 = vmatprep.subr.mxu0 0.0
      %1481 = vmatpush1.msra.mxu0 0.0
      %1482 = vmatprep.subr.mxu0 0.0
      %1483 = vmatpush1.msra.mxu0 0.0
      %1484 = vmatprep.subr.mxu0 0.0
      %1485 = vmatpush1.msra.mxu0 0.0
      %1486 = vmatprep.subr.mxu0 0.0
      %1487 = vmatpush1.msra.mxu0 0.0
      %1488 = vmatprep.subr.mxu0 0.0
      %1489 = vmatpush1.msra.mxu0 0.0
      %1490 = vmatprep.subr.mxu0 0.0
      %1491 = vmatpush1.msra.mxu0 0.0
      %1492 = vmatprep.subr.mxu0 0.0
      %1493 = vmatpush1.msra.mxu0 0.0
      %1494 = vmatprep.subr.mxu0 0.0
      %1495 = vmatpush1.msra.mxu0 0.0
      %1496 = vmatprep.subr.mxu0 0.0
      %1497 = vmatpush1.msra.mxu0 0.0
      %1498 = vmatprep.subr.mxu0 0.0
      %1499 = vmatpush1.msra.mxu0 0.0
      %1500 = vmatprep.subr.mxu0 0.0
      %1501 = vmatpush1.msra.mxu0 0.0
      %1502 = vmatprep.subr.mxu0 0.0
      %1503 = vmatpush1.msra.mxu0 0.0
      %1504 = vmatprep.subr.mxu0 0.0
      %1505 = vmatpush1.msra.mxu0 0.0
      %1506 = vmatprep.subr.mxu0 0.0
      %1507 = vmatpush1.msra.mxu0 0.0
      %1508 = vmatprep.subr.mxu0 0.0
      %1509 = vmatpush1.msra.mxu0 0.0
      %1510 = vmatprep.subr.mxu0 0.0
      %1511 = vmatpush1.msra.mxu0 0.0
      %1512 = vmatprep.subr.mxu0 0.0
      %1513 = vmatpush1.msra.mxu0 0.0
      %1514 = vmatprep.subr.mxu0 0.0
      %1515 = vmatpush1.msra.mxu0 0.0
      %1516 = vmatprep.subr.mxu0 0.0
      %1517 = vmatpush1.msra.mxu0 0.0
      %1518 = vmatprep.subr.mxu0 0.0
      %1519 = vmatpush1.msra.mxu0 0.0
      %1520 = vmatprep.subr.mxu0 0.0
      %1521 = vmatpush1.msra.mxu0 0.0
      %1522 = vmatprep.subr.mxu0 0.0
      %1523 = vmatpush1.msra.mxu0 0.0
      %1524 = vmatprep.subr.mxu0 0.0
      %1525 = vmatpush1.msra.mxu0 0.0
      %1526 = vmatprep.subr.mxu0 0.0
      %1527 = vmatpush1.msra.mxu0 0.0
      %1528 = vmatprep.subr.mxu0 0.0
      %1529 = vmatpush1.msra.mxu0 0.0
      %1530 = vmatprep.subr.mxu0 0.0
      %1531 = vmatpush1.msra.mxu0 0.0
      %1532 = vmatprep.subr.mxu0 0.0
      %1533 = vmatpush1.msra.mxu0 0.0
      %1534 = vmatprep.subr.mxu0 0.0
      %1535 = vmatpush1.msra.mxu0 0.0
      %1536 = vmatprep.mubr.f32.mxu0 0.0
      %1537 = vmatmul.mubr.f32.gmra.mrb[0].mxu0 %v1464
      %v1538 = vpop.f32.mrb[0].mxu0
      %v1539 = vadd.f32 0.0, %v1538
      %v1540 = vpop.f32.mrb[0].mxu0
      %v1541 = vadd.f32 0.0, %v1540
      %1542 = vdwg.mxu0
      %1543 = vmatprep.subr.mxu0 0.0
      %1544 = vmatpush1.msra.mxu0 %v1470
      %1545 = vmatprep.subr.mxu0 0.0
      %1546 = vmatpush1.msra.mxu0 0.0
      %1547 = vmatprep.subr.mxu0 0.0
      %1548 = vmatpush1.msra.mxu0 0.0
      %1549 = vmatprep.subr.mxu0 0.0
      %1550 = vmatpush1.msra.mxu0 0.0
      %1551 = vmatprep.subr.mxu0 0.0
      %1552 = vmatpush1.msra.mxu0 0.0
      %1553 = vmatprep.subr.mxu0 0.0
      %1554 = vmatpush1.msra.mxu0 0.0
      %1555 = vmatprep.subr.mxu0 0.0
      %1556 = vmatpush1.msra.mxu0 0.0
      %1557 = vmatprep.subr.mxu0 0.0
      %1558 = vmatpush1.msra.mxu0 0.0
      %1559 = vmatprep.subr.mxu0 0.0
      %1560 = vmatpush1.msra.mxu0 0.0
      %1561 = vmatprep.subr.mxu0 0.0
      %1562 = vmatpush1.msra.mxu0 0.0
      %1563 = vmatprep.subr.mxu0 0.0
      %1564 = vmatpush1.msra.mxu0 0.0
      %1565 = vmatprep.subr.mxu0 0.0
      %1566 = vmatpush1.msra.mxu0 0.0
      %1567 = vmatprep.subr.mxu0 0.0
      %1568 = vmatpush1.msra.mxu0 0.0
      %1569 = vmatprep.subr.mxu0 0.0
      %1570 = vmatpush1.msra.mxu0 0.0
      %1571 = vmatprep.subr.mxu0 0.0
      %1572 = vmatpush1.msra.mxu0 0.0
      %1573 = vmatprep.subr.mxu0 0.0
      %1574 = vmatpush1.msra.mxu0 0.0
      %1575 = vmatprep.subr.mxu0 0.0
      %1576 = vmatpush1.msra.mxu0 0.0
      %1577 = vmatprep.subr.mxu0 0.0
      %1578 = vmatpush1.msra.mxu0 0.0
      %1579 = vmatprep.subr.mxu0 0.0
      %1580 = vmatpush1.msra.mxu0 0.0
      %1581 = vmatprep.subr.mxu0 0.0
      %1582 = vmatpush1.msra.mxu0 0.0
      %1583 = vmatprep.subr.mxu0 0.0
      %1584 = vmatpush1.msra.mxu0 0.0
      %1585 = vmatprep.subr.mxu0 0.0
      %1586 = vmatpush1.msra.mxu0 0.0
      %1587 = vmatprep.subr.mxu0 0.0
      %1588 = vmatpush1.msra.mxu0 0.0
      %1589 = vmatprep.subr.mxu0 0.0
      %1590 = vmatpush1.msra.mxu0 0.0
      %1591 = vmatprep.subr.mxu0 0.0
      %1592 = vmatpush1.msra.mxu0 0.0
      %1593 = vmatprep.subr.mxu0 0.0
      %1594 = vmatpush1.msra.mxu0 0.0
      %1595 = vmatprep.subr.mxu0 0.0
      %1596 = vmatpush1.msra.mxu0 0.0
      %1597 = vmatprep.subr.mxu0 0.0
      %1598 = vmatpush1.msra.mxu0 0.0
      %1599 = vmatprep.subr.mxu0 0.0
      %1600 = vmatpush1.msra.mxu0 0.0
      %1601 = vmatprep.subr.mxu0 0.0
      %1602 = vmatpush1.msra.mxu0 0.0
      %1603 = vmatprep.subr.mxu0 0.0
      %1604 = vmatpush1.msra.mxu0 0.0
      %1605 = vmatprep.subr.mxu0 0.0
      %1606 = vmatpush1.msra.mxu0 0.0
      %1607 = vmatprep.mubr.f32.mxu0 0.0
      %1608 = vmatmul.mubr.f32.gmra.mrb[0].mxu0 %v1464
      %v1609 = vpop.f32.mrb[0].mxu0
      %v1610 = vadd.f32 0.0, %v1609
      %v1611 = vpop.f32.mrb[0].mxu0
      %1612 = vdwg.mxu0
      %v1613 = vadd.f32 %v1440, %v1539
      %v1614 = vadd.f32 %v1441, %v1541
      %v1615 = vadd.f32 %v1442, %v1610
      %v1616 = vld [vmem:[%s245] sm:$0xff]
      %v1617 = vld [vmem:[%s245 + $0x8] sm:$0xff]
      %s1618 = scalar_lea.vmem %s1, 64
      %v1619 = vld [vmem:[%s1618] sm:$0xff]
      %v1622 = vcombine.high %v1616, %v1616
      %v1623 = vcombine.high %v1617, %v1617
      %1624 = vrot.lane.b32.xlu0 %v1616, 90
      %v1625 = vpop.permute.xlu0 %1624
      %1626 = vrot.lane.b32.xlu0 %v1622, 90
      %v1627 = vpop.permute.xlu0 %1626
      %1628 = vrot.lane.b32.xlu0 %v1617, 90
      %v1629 = vpop.permute.xlu0 %1628
      %1630 = vrot.lane.b32.xlu0 %v1623, 90
      %v1631 = vpop.permute.xlu0 %1630
      %vm1632 = vcmask 736256
      %v1633 = vsel %vm1632, %v1625, %v1627
      %v1634 = vsel %vm1632, %v1627, %v1629
      %v1635 = vsel %vm1632, %v1629, %v1631
      %v1637 = vsel %vm273, %v1619, 0
      %v1639 = vsel %vm277, %v1633, 0
      %v1641 = vsel %vm277, %v1634, 0
      %v1643 = vsel %vm277, %v1635, 0
      %1645 = vmatprep.subr.mxu0 %v1641
      %1646 = vmatpush1.msra.mxu0 %v1639
      %1647 = vmatprep.subr.mxu0 0.0
      %1648 = vmatpush1.msra.mxu0 0.0
      %1649 = vmatprep.subr.mxu0 0.0
      %1650 = vmatpush1.msra.mxu0 0.0
      %1651 = vmatprep.subr.mxu0 0.0
      %1652 = vmatpush1.msra.mxu0 0.0
      %1653 = vmatprep.subr.mxu0 0.0
      %1654 = vmatpush1.msra.mxu0 0.0
      %1655 = vmatprep.subr.mxu0 0.0
      %1656 = vmatpush1.msra.mxu0 0.0
      %1657 = vmatprep.subr.mxu0 0.0
      %1658 = vmatpush1.msra.mxu0 0.0
      %1659 = vmatprep.subr.mxu0 0.0
      %1660 = vmatpush1.msra.mxu0 0.0
      %1661 = vmatprep.subr.mxu0 0.0
      %1662 = vmatpush1.msra.mxu0 0.0
      %1663 = vmatprep.subr.mxu0 0.0
      %1664 = vmatpush1.msra.mxu0 0.0
      %1665 = vmatprep.subr.mxu0 0.0
      %1666 = vmatpush1.msra.mxu0 0.0
      %1667 = vmatprep.subr.mxu0 0.0
      %1668 = vmatpush1.msra.mxu0 0.0
      %1669 = vmatprep.subr.mxu0 0.0
      %1670 = vmatpush1.msra.mxu0 0.0
      %1671 = vmatprep.subr.mxu0 0.0
      %1672 = vmatpush1.msra.mxu0 0.0
      %1673 = vmatprep.subr.mxu0 0.0
      %1674 = vmatpush1.msra.mxu0 0.0
      %1675 = vmatprep.subr.mxu0 0.0
      %1676 = vmatpush1.msra.mxu0 0.0
      %1677 = vmatprep.subr.mxu0 0.0
      %1678 = vmatpush1.msra.mxu0 0.0
      %1679 = vmatprep.subr.mxu0 0.0
      %1680 = vmatpush1.msra.mxu0 0.0
      %1681 = vmatprep.subr.mxu0 0.0
      %1682 = vmatpush1.msra.mxu0 0.0
      %1683 = vmatprep.subr.mxu0 0.0
      %1684 = vmatpush1.msra.mxu0 0.0
      %1685 = vmatprep.subr.mxu0 0.0
      %1686 = vmatpush1.msra.mxu0 0.0
      %1687 = vmatprep.subr.mxu0 0.0
      %1688 = vmatpush1.msra.mxu0 0.0
      %1689 = vmatprep.subr.mxu0 0.0
      %1690 = vmatpush1.msra.mxu0 0.0
      %1691 = vmatprep.subr.mxu0 0.0
      %1692 = vmatpush1.msra.mxu0 0.0
      %1693 = vmatprep.subr.mxu0 0.0
      %1694 = vmatpush1.msra.mxu0 0.0
      %1695 = vmatprep.subr.mxu0 0.0
      %1696 = vmatpush1.msra.mxu0 0.0
      %1697 = vmatprep.subr.mxu0 0.0
      %1698 = vmatpush1.msra.mxu0 0.0
      %1699 = vmatprep.subr.mxu0 0.0
      %1700 = vmatpush1.msra.mxu0 0.0
      %1701 = vmatprep.subr.mxu0 0.0
      %1702 = vmatpush1.msra.mxu0 0.0
      %1703 = vmatprep.subr.mxu0 0.0
      %1704 = vmatpush1.msra.mxu0 0.0
      %1705 = vmatprep.subr.mxu0 0.0
      %1706 = vmatpush1.msra.mxu0 0.0
      %1707 = vmatprep.subr.mxu0 0.0
      %1708 = vmatpush1.msra.mxu0 0.0
      %1709 = vmatprep.mubr.f32.mxu0 0.0
      %1710 = vmatmul.mubr.f32.gmra.mrb[0].mxu0 %v1637
      %v1711 = vpop.f32.mrb[0].mxu0
      %v1712 = vadd.f32 0.0, %v1711
      %v1713 = vpop.f32.mrb[0].mxu0
      %v1714 = vadd.f32 0.0, %v1713
      %1715 = vdwg.mxu0
      %1716 = vmatprep.subr.mxu0 0.0
      %1717 = vmatpush1.msra.mxu0 %v1643
      %1718 = vmatprep.subr.mxu0 0.0
      %1719 = vmatpush1.msra.mxu0 0.0
      %1720 = vmatprep.subr.mxu0 0.0
      %1721 = vmatpush1.msra.mxu0 0.0
      %1722 = vmatprep.subr.mxu0 0.0
      %1723 = vmatpush1.msra.mxu0 0.0
      %1724 = vmatprep.subr.mxu0 0.0
      %1725 = vmatpush1.msra.mxu0 0.0
      %1726 = vmatprep.subr.mxu0 0.0
      %1727 = vmatpush1.msra.mxu0 0.0
      %1728 = vmatprep.subr.mxu0 0.0
      %1729 = vmatpush1.msra.mxu0 0.0
      %1730 = vmatprep.subr.mxu0 0.0
      %1731 = vmatpush1.msra.mxu0 0.0
      %1732 = vmatprep.subr.mxu0 0.0
      %1733 = vmatpush1.msra.mxu0 0.0
      %1734 = vmatprep.subr.mxu0 0.0
      %1735 = vmatpush1.msra.mxu0 0.0
      %1736 = vmatprep.subr.mxu0 0.0
      %1737 = vmatpush1.msra.mxu0 0.0
      %1738 = vmatprep.subr.mxu0 0.0
      %1739 = vmatpush1.msra.mxu0 0.0
      %1740 = vmatprep.subr.mxu0 0.0
      %1741 = vmatpush1.msra.mxu0 0.0
      %1742 = vmatprep.subr.mxu0 0.0
      %1743 = vmatpush1.msra.mxu0 0.0
      %1744 = vmatprep.subr.mxu0 0.0
      %1745 = vmatpush1.msra.mxu0 0.0
      %1746 = vmatprep.subr.mxu0 0.0
      %1747 = vmatpush1.msra.mxu0 0.0
      %1748 = vmatprep.subr.mxu0 0.0
      %1749 = vmatpush1.msra.mxu0 0.0
      %1750 = vmatprep.subr.mxu0 0.0
      %1751 = vmatpush1.msra.mxu0 0.0
      %1752 = vmatprep.subr.mxu0 0.0
      %1753 = vmatpush1.msra.mxu0 0.0
      %1754 = vmatprep.subr.mxu0 0.0
      %1755 = vmatpush1.msra.mxu0 0.0
      %1756 = vmatprep.subr.mxu0 0.0
      %1757 = vmatpush1.msra.mxu0 0.0
      %1758 = vmatprep.subr.mxu0 0.0
      %1759 = vmatpush1.msra.mxu0 0.0
      %1760 = vmatprep.subr.mxu0 0.0
      %1761 = vmatpush1.msra.mxu0 0.0
      %1762 = vmatprep.subr.mxu0 0.0
      %1763 = vmatpush1.msra.mxu0 0.0
      %1764 = vmatprep.subr.mxu0 0.0
      %1765 = vmatpush1.msra.mxu0 0.0
      %1766 = vmatprep.subr.mxu0 0.0
      %1767 = vmatpush1.msra.mxu0 0.0
      %1768 = vmatprep.subr.mxu0 0.0
      %1769 = vmatpush1.msra.mxu0 0.0
      %1770 = vmatprep.subr.mxu0 0.0
      %1771 = vmatpush1.msra.mxu0 0.0
      %1772 = vmatprep.subr.mxu0 0.0
      %1773 = vmatpush1.msra.mxu0 0.0
      %1774 = vmatprep.subr.mxu0 0.0
      %1775 = vmatpush1.msra.mxu0 0.0
      %1776 = vmatprep.subr.mxu0 0.0
      %1777 = vmatpush1.msra.mxu0 0.0
      %1778 = vmatprep.subr.mxu0 0.0
      %1779 = vmatpush1.msra.mxu0 0.0
      %1780 = vmatprep.mubr.f32.mxu0 0.0
      %1781 = vmatmul.mubr.f32.gmra.mrb[0].mxu0 %v1637
      %v1782 = vpop.f32.mrb[0].mxu0
      %v1783 = vadd.f32 0.0, %v1782
      %v1784 = vpop.f32.mrb[0].mxu0
      %1785 = vdwg.mxu0
      %v1786 = vadd.f32 %v1613, %v1712
      %v1787 = vadd.f32 %v1614, %v1714
      %v1788 = vadd.f32 %v1615, %v1783
      %v1789 = vld [vmem:[%s2] sm:$0xff]
      %1791 = vset.pattern.permute.xlu0 0
      %1792 = vperm.xlu0 %1791, %v1789
      %v1793 = vpop.permute.xlu0 %1792
      %v1795 = vadd.f32 %v1786, %v1793
      %v1796 = vadd.f32 %v1787, %v1793
      %v1797 = vadd.f32 %v1788, %v1793
      %v1798 = vmax.f32 %v1795, 0.0
      %v1799 = vmax.f32 %v1796, 0.0
      %v1800 = vmax.f32 %v1797, 0.0
      %v1801 = vld [vmem:[%s5] sm:$0x7]
      %v1803 = vlaneseq
      %v1804 = vshrl.u32 %v1803, 7
      %v1805 = vsub.s32 0, %v1804
      %v1806 = vrot.slane %v1801, %v1805
      %v1807 = vlaneseq
      %v1808 = vshrl.u32 %v1807, 7
      %v1809 = vsub.s32 1, %v1808
      %v1810 = vrot.slane %v1801, %v1809
      %v1811 = vlaneseq
      %v1812 = vshrl.u32 %v1811, 7
      %v1813 = vsub.s32 2, %v1812
      %v1814 = vrot.slane %v1801, %v1813
      %v1818 = vmul.f32 %v1798, %v1806
      %v1819 = vmul.f32 %v1799, %v1810
      %v1820 = vmul.f32 %v1800, %v1814
      %v1821 = vadd.f32 %v1818, %v1819
      %v1822 = vadd.f32 %v1821, %v1820
      %1823 = vadd.xlane.f32.xlu0 %v1822
      %v1824 = vpop.xlane.xlu0 %1823
      %v1825 = vld [vmem:[%s3] sm:$0xff]
      %v1826 = vmul.f32 %v1824, %v1825
      %v1827 = vrot.slane %v1826, 4
      %v1828 = vadd.f32 %v1826, %v1827
      %v1829 = vrot.slane %v1828, 2
      %v1830 = vadd.f32 %v1828, %v1829
      %v1831 = vrot.slane %v1830, 1
      %v1832 = vadd.f32 %v1830, %v1831
      %v1833 = vld [vmem:[%s4] sm:$0x1]
      %v1834 = vadd.f32 %v1832, %v1833
      %v1835 = vlaneseq
      %v1836 = vshrl.u32 %v1835, 7
      %v1837 = vsub.s32 0, %v1836
      %v1838 = vrot.slane %v1834, %v1837
      %1839 = vst [vmem:[%s249] sm:$0xff] %v1838
      %p1840 = scmp.lt.s32.totalorder %s17, 1
      %s1841 = scalar_select %p1840, %s17, 1
      %s1842 = smul.addr %s1841, 8
      %s1843 = scalar_lea.vmem %s6, %s1842
      // Predicated region
      $region45: #{baseline_forward.1} parent=43 // pred_check
        %p1844 = pneg %p166
      $region46: #{baseline_forward.1} parent=43 // pred_check_branch
        %1846 = sbr.rel (%p1844) target = $region48
      $region47: #{baseline_forward.1} parent=43 // pred_region
        _
      $region48: #{baseline_forward.1} parent=43 // pred_fallthru
        _
    $region44: #{baseline_forward.1} parent=5 // pred_fallthru
      _
    %p1847 = scmp.le.s32.totalorder 2, %s12
    // Predicated region
    $region49: #{baseline_forward.1} parent=5 // pred_check
      %p1848 = pneg %p1847
    $region50: #{baseline_forward.1} parent=5 // pred_check_branch
      %1850 = sbr.rel (%p1848) target = $region52
    $region51: #{baseline_forward.1} parent=5 // pred_region
      %s1851 = ssub.s32 %s12, 2
      // Predicated region
      $region53: #{baseline_forward.1} parent=51 // pred_check
        %p1852 = pneg %p172
      $region54: #{baseline_forward.1} parent=51 // pred_check_branch
        %1854 = sbr.rel (%p1852) target = $region56
      $region55: #{baseline_forward.1} parent=51 // pred_region
        %p1855 = scmp.lt.s32.totalorder %s18, 1
        %s1856 = scalar_select %p1855, %s18, 1
        %s1857 = smul.addr %s1856, 8
        %s1858 = scalar_lea.vmem %s6, %s1857
      $region56: #{baseline_forward.1} parent=51 // pred_fallthru
        _
    $region52: #{baseline_forward.1} parent=5 // pred_fallthru
      _
  $region6: #{baseline_forward.1} parent=0 // loop_footer
    %s16 = sadd.s32 1, %s12
  $region7: #{baseline_forward.1} parent=0 // loop_footer_branch
    %11 = sbr.rel target = $region3
  $region8: #{baseline_forward.1} parent=0 // loop_exit
    _

</llo_original>
